<compile_context>
chip_gen: v7x
topology: tpu7x:2x2x1
jax: 0.10.0
libtpu: 0.0.40
codegen_flags: <defaults>
</compile_context>

<pallas_src>
import functools

import jax
import jax.numpy as jnp
from jax.experimental import pallas as pl
from jax.experimental.pallas import tpu as pltpu


def _conv_bn_kernel(x_ref, w_ref, bias_ref, o_ref, *,
                    kh_size, kw_size, stride, dilation,
                    row_block, w_out, compute_dtype):
    """One (batch element, output-row tile) per grid step.

    x_ref:    (1, Cin, Hp, Wp)     full padded image of this batch element (VMEM)
    w_ref:    (KH, KW, Cout, Cin)  conv weights with BN scale folded in
    bias_ref: (Cout, 1)            folded BN bias
    o_ref:    (1, Cout, TH*Wout)   lane-dense NCHW-flat output tile
    """
    c_in = x_ref.shape[1]
    c_out = o_ref.shape[1]

    r = pl.program_id(1)
    row0 = pl.multiple_of(r * row_block * stride, row_block * stride)

    acc = jnp.zeros((c_out, row_block * w_out), dtype=jnp.float32)

    # Direct convolution: one (Cout,Cin) x (Cin, TH*Wout) MXU matmul per tap.
    for kh in range(kh_size):
        for kw in range(kw_size):
            if stride == 1:
                patch = x_ref[0, :,
                              pl.ds(row0 + kh * dilation, row_block),
                              pl.ds(kw * dilation, w_out)]
            else:
                # TODO(synk): strided taps lower to shuffles/VMEM copies; for
                # stride > 1 pre-split even/odd rows/cols in the wrapper for perf.
                patch = x_ref[0, :,
                              pl.ds(row0 + kh * dilation, row_block, stride),
                              pl.ds(kw * dilation, w_out, stride)]
            patch = patch.reshape(c_in, row_block * w_out)
            acc += jnp.dot(w_ref[kh, kw].astype(compute_dtype),
                           patch.astype(compute_dtype),
                           preferred_element_type=jnp.float32)

    # BN bias (scale already folded into the weights).  Epilogue stays f32.
    o_ref[0] = (acc + bias_ref[...]).astype(o_ref.dtype)


def _pick_row_block(h_out, w_out, target_flat=2048):
    """Largest row tile TH with TH | Hout and TH*Wout a multiple of 128 (lane-dense,
    legal block) not exceeding target_flat lanes; falls back to the full extent."""
    candidates = [th for th in range(1, h_out + 1)
                  if h_out % th == 0 and (th * w_out) % 128 == 0]
    if not candidates:
        return h_out
    fitting = [th for th in candidates if th * w_out <= target_flat]
    return max(fitting) if fitting else min(candidates)


def basic_conv2d(x_nchw, weight_oihw, gamma, beta, running_mean, running_var,
                 *, stride=1, padding=0, dilation=1, eps=1e-5,
                 row_block=None, compute_dtype=jnp.float32):
    """Forward of BasicConv2d (eval-mode BN).  x_nchw: (N, Cin, H, W) float32.

    compute_dtype: dtype of the MXU operands (jnp.bfloat16 recommended on v6e/v7x
    at production channel counts; accumulation stays f32).  Default f32 matches
    the f32 reference tightly.
    """
    n, c_in, h, w = x_nchw.shape
    c_out, _, kh, kw = weight_oihw.shape

    h_out = (h + 2 * padding - dilation * (kh - 1) - 1) // stride + 1
    w_out = (w + 2 * padding - dilation * (kw - 1) - 1) // stride + 1

    if row_block is None:
        row_block = _pick_row_block(h_out, w_out)
    assert h_out % row_block == 0, (h_out, row_block)
    assert (row_block * w_out) % 128 == 0 or row_block == h_out, \
        "output tile must be lane-aligned or full-extent"
    n_row_tiles = h_out // row_block

    # ---- glue (plain JAX): padding + BN folding; no layout transposes of x ----
    # TODO(synk): padding is still materialized in HBM here; moving the halo
    # zero-fill into the kernel would save one HBM pass of the input.
    x_pad = jnp.pad(x_nchw,
                    ((0, 0), (0, 0), (padding, padding), (padding, padding)))
    hp, wp = x_pad.shape[2], x_pad.shape[3]

    # Fold eval-mode BN:  conv(x, w)*scale + bias  ==  conv(x, w*scale) + bias
    scale = gamma / jnp.sqrt(running_var + eps)                   # (Cout,)
    bias = beta - running_mean * scale                            # (Cout,)
    w_folded = weight_oihw * scale[:, None, None, None]           # OIHW, scale folded
    w_khkw_oc_ic = jnp.transpose(w_folded, (2, 3, 0, 1)).astype(compute_dtype)
    bias_col = bias.reshape(c_out, 1).astype(jnp.float32)

    kernel = functools.partial(
        _conv_bn_kernel,
        kh_size=kh, kw_size=kw, stride=stride, dilation=dilation,
        row_block=row_block, w_out=w_out, compute_dtype=compute_dtype)

    # Explicit VMEM budget (auto-pipeline double-buffers every operand); keep it
    # under what v7x (64 MiB physical / 32 MiB default scoped) can provide.
    bpe = jnp.dtype(jnp.float32).itemsize
    in_block = c_in * hp * wp * bpe
    w_block = kh * kw * c_out * c_in * jnp.dtype(compute_dtype).itemsize
    out_block = c_out * row_block * w_out * bpe
    est = 2 * (in_block + w_block + out_block + c_out * bpe) + (1 << 20)
    vmem_limit = int(min(max(est, 4 << 20), 28 << 20))

    out_flat = pl.pallas_call(
        kernel,
        out_shape=jax.ShapeDtypeStruct((n, c_out, h_out * w_out), jnp.float32),
        grid_spec=pltpu.PrefetchScalarGridSpec(
            num_scalar_prefetch=0,
            grid=(n, n_row_tiles),
            in_specs=[
                # Full padded image per batch element; its block index is constant
                # in r, so it is DMA'd once per batch element, not per row tile.
                pl.BlockSpec((1, c_in, hp, wp), lambda b, r: (b, 0, 0, 0)),
                # Grid-invariant weights.
                # TODO(synk): at large Cin*Cout pass pipeline_mode=pl.Buffered(1)
                # (or stage once into a VMEM scratch) to skip double-buffering.
                pl.BlockSpec((kh, kw, c_out, c_in), lambda b, r: (0, 0, 0, 0)),
                pl.BlockSpec((c_out, 1), lambda b, r: (0, 0)),
            ],
            out_specs=pl.BlockSpec((1, c_out, row_block * w_out),
                                   lambda b, r: (b, 0, r)),
        ),
        compiler_params=pltpu.CompilerParams(
            dimension_semantics=("parallel", "parallel"),
            vmem_limit_bytes=vmem_limit),
    )(x_pad, w_khkw_oc_ic, bias_col)

    return out_flat.reshape(n, c_out, h_out, w_out)


def _reference(x_nchw, weight_oihw, gamma, beta, running_mean, running_var,
               *, stride, padding, dilation, eps=1e-5):
    """Pure-JAX reference (lax conv + eval-mode BN) for a correctness check."""
    y = jax.lax.conv_general_dilated(
        x_nchw, weight_oihw,
        window_strides=(stride, stride),
        padding=((padding, padding), (padding, padding)),
        rhs_dilation=(dilation, dilation),
        dimension_numbers=("NCHW", "OIHW", "NCHW"))
    scale = gamma / jnp.sqrt(running_var + eps)
    bias = beta - running_mean * scale
    return y * scale[None, :, None, None] + bias[None, :, None, None]


if __name__ == "__main__":
    # BasicConv2d(in_planes=4, out_planes=8, kernel_size=3, stride=1, padding=1)
    N, C_IN, H, W = 2, 4, 16, 16
    C_OUT, K = 8, 3
    STRIDE, PADDING, DILATION = 1, 1, 1

    key = jax.random.PRNGKey(0)
    k_x, k_w, k_g, k_b, k_m, k_v = jax.random.split(key, 6)

    x = jax.random.normal(k_x, (N, C_IN, H, W), dtype=jnp.float32)
    weight = jax.random.normal(k_w, (C_OUT, C_IN, K, K), dtype=jnp.float32) * 0.1
    gamma = jax.random.uniform(k_g, (C_OUT,), minval=0.5, maxval=1.5,
                               dtype=jnp.float32)
    beta = jax.random.normal(k_b, (C_OUT,), dtype=jnp.float32) * 0.1
    running_mean = jax.random.normal(k_m, (C_OUT,), dtype=jnp.float32) * 0.1
    running_var = jax.random.uniform(k_v, (C_OUT,), minval=0.5, maxval=1.5,
                                     dtype=jnp.float32)

    out = basic_conv2d(x, weight, gamma, beta, running_mean, running_var,
                       stride=STRIDE, padding=PADDING, dilation=DILATION,
                       row_block=8)   # 2 row tiles -> exercises the spatial grid axis
    out = jax.block_until_ready(out)

    ref = _reference(x, weight, gamma, beta, running_mean, running_var,
                     stride=STRIDE, padding=PADDING, dilation=DILATION)
    assert out.shape == (N, C_OUT, H, W), out.shape
    assert jnp.allclose(out, ref, atol=1e-4, rtol=1e-4), \
        float(jnp.max(jnp.abs(out - ref)))

    print("KERNEL_OK")
</pallas_src>

<mosaic_0001>
module attributes {stable_mosaic.version = 11 : i64} {
  func.func @_conv_bn_kernel(%arg0: i32, %arg1: i32, %arg2: memref<1x4x18x18xf32, #tpu.memory_space<vmem>>, %arg3: memref<3x3x8x4xf32, #tpu.memory_space<vmem>>, %arg4: memref<8x1xf32, #tpu.memory_space<vmem>>, %arg5: memref<1x8x128xf32, #tpu.memory_space<vmem>>) attributes {dimension_semantics = [#tpu.dimension_semantics<parallel>, #tpu.dimension_semantics<parallel>], iteration_bounds = array<i64: 2, 2>, scalar_prefetch = 0 : i64, scratch_operands = 0 : i64, tpu.core_type = #tpu.core_type<tc>, window_params = [{transform_indices = @transform_0, window_bounds = array<i64: 1, 4, 18, 18>}, {pipeline_mode = #tpu.pipeline_mode<synchronous>, transform_indices = @transform_1, window_bounds = array<i64: 3, 3, 8, 4>}, {pipeline_mode = #tpu.pipeline_mode<synchronous>, transform_indices = @transform_2, window_bounds = array<i64: 8, 1>}, {transform_indices = @transform_3, window_bounds = array<i64: 1, 8, 128>}]} {
    %c8_i32 = arith.constant 8 : i32
    %0 = arith.muli %arg1, %c8_i32 : i32
    %c1_i32 = arith.constant 1 : i32
    %1 = arith.muli %0, %c1_i32 : i32
    %2 = tpu.assume_multiple %1, 8 : i32
    %cst = arith.constant 0.000000e+00 : f32
    %3 = vector.broadcast %cst : f32 to vector<8x128xf32>
    %c0_i32 = arith.constant 0 : i32
    %4 = arith.addi %2, %c0_i32 : i32
    %c0 = arith.constant 0 : index
    %c0_0 = arith.constant 0 : index
    %5 = arith.index_cast %4 : i32 to index
    %c0_1 = arith.constant 0 : index
    %6 = vector.load %arg2[%c0, %c0_0, %5, %c0_1] : memref<1x4x18x18xf32, #tpu.memory_space<vmem>>, vector<1x4x8x16xf32>
    %7 = vector.shape_cast %6 : vector<1x4x8x16xf32> to vector<4x8x16xf32>
    %8 = vector.shape_cast %7 : vector<4x8x16xf32> to vector<4x128xf32>
    %c0_2 = arith.constant 0 : index
    %c0_3 = arith.constant 0 : index
    %c0_4 = arith.constant 0 : index
    %c0_5 = arith.constant 0 : index
    %9 = vector.load %arg3[%c0_2, %c0_3, %c0_4, %c0_5] : memref<3x3x8x4xf32, #tpu.memory_space<vmem>>, vector<1x1x8x4xf32>
    %10 = vector.shape_cast %9 : vector<1x1x8x4xf32> to vector<8x4xf32>
    %cst_6 = arith.constant dense<0.000000e+00> : vector<8x128xf32>
    %11 = tpu.matmul %10, %8, %cst_6 {dimension_numbers = #tpu.dot_dimension_numbers<[1], [0], [0], [1], [0, 0, 1, 1], [], []>} : vector<8x4xf32>, vector<4x128xf32>, vector<8x128xf32> -> vector<8x128xf32>
    %12 = arith.addf %3, %11 : vector<8x128xf32>
    %c0_i32_7 = arith.constant 0 : i32
    %13 = arith.addi %2, %c0_i32_7 : i32
    %c0_8 = arith.constant 0 : index
    %c0_9 = arith.constant 0 : index
    %14 = arith.index_cast %13 : i32 to index
    %c1 = arith.constant 1 : index
    %15 = vector.load %arg2[%c0_8, %c0_9, %14, %c1] : memref<1x4x18x18xf32, #tpu.memory_space<vmem>>, vector<1x4x8x16xf32>
    %16 = vector.shape_cast %15 : vector<1x4x8x16xf32> to vector<4x8x16xf32>
    %17 = vector.shape_cast %16 : vector<4x8x16xf32> to vector<4x128xf32>
    %c0_10 = arith.constant 0 : index
    %c1_11 = arith.constant 1 : index
    %c0_12 = arith.constant 0 : index
    %c0_13 = arith.constant 0 : index
    %18 = vector.load %arg3[%c0_10, %c1_11, %c0_12, %c0_13] : memref<3x3x8x4xf32, #tpu.memory_space<vmem>>, vector<1x1x8x4xf32>
    %19 = vector.shape_cast %18 : vector<1x1x8x4xf32> to vector<8x4xf32>
    %cst_14 = arith.constant dense<0.000000e+00> : vector<8x128xf32>
    %20 = tpu.matmul %19, %17, %cst_14 {dimension_numbers = #tpu.dot_dimension_numbers<[1], [0], [0], [1], [0, 0, 1, 1], [], []>} : vector<8x4xf32>, vector<4x128xf32>, vector<8x128xf32> -> vector<8x128xf32>
    %21 = arith.addf %12, %20 : vector<8x128xf32>
    %c0_i32_15 = arith.constant 0 : i32
    %22 = arith.addi %2, %c0_i32_15 : i32
    %c0_16 = arith.constant 0 : index
    %c0_17 = arith.constant 0 : index
    %23 = arith.index_cast %22 : i32 to index
    %c2 = arith.constant 2 : index
    %24 = vector.load %arg2[%c0_16, %c0_17, %23, %c2] : memref<1x4x18x18xf32, #tpu.memory_space<vmem>>, vector<1x4x8x16xf32>
    %25 = vector.shape_cast %24 : vector<1x4x8x16xf32> to vector<4x8x16xf32>
    %26 = vector.shape_cast %25 : vector<4x8x16xf32> to vector<4x128xf32>
    %c0_18 = arith.constant 0 : index
    %c2_19 = arith.constant 2 : index
    %c0_20 = arith.constant 0 : index
    %c0_21 = arith.constant 0 : index
    %27 = vector.load %arg3[%c0_18, %c2_19, %c0_20, %c0_21] : memref<3x3x8x4xf32, #tpu.memory_space<vmem>>, vector<1x1x8x4xf32>
    %28 = vector.shape_cast %27 : vector<1x1x8x4xf32> to vector<8x4xf32>
    %cst_22 = arith.constant dense<0.000000e+00> : vector<8x128xf32>
    %29 = tpu.matmul %28, %26, %cst_22 {dimension_numbers = #tpu.dot_dimension_numbers<[1], [0], [0], [1], [0, 0, 1, 1], [], []>} : vector<8x4xf32>, vector<4x128xf32>, vector<8x128xf32> -> vector<8x128xf32>
    %30 = arith.addf %21, %29 : vector<8x128xf32>
    %c1_i32_23 = arith.constant 1 : i32
    %31 = arith.addi %2, %c1_i32_23 : i32
    %c0_24 = arith.constant 0 : index
    %c0_25 = arith.constant 0 : index
    %32 = arith.index_cast %31 : i32 to index
    %c0_26 = arith.constant 0 : index
    %33 = vector.load %arg2[%c0_24, %c0_25, %32, %c0_26] : memref<1x4x18x18xf32, #tpu.memory_space<vmem>>, vector<1x4x8x16xf32>
    %34 = vector.shape_cast %33 : vector<1x4x8x16xf32> to vector<4x8x16xf32>
    %35 = vector.shape_cast %34 : vector<4x8x16xf32> to vector<4x128xf32>
    %c1_27 = arith.constant 1 : index
    %c0_28 = arith.constant 0 : index
    %c0_29 = arith.constant 0 : index
    %c0_30 = arith.constant 0 : index
    %36 = vector.load %arg3[%c1_27, %c0_28, %c0_29, %c0_30] : memref<3x3x8x4xf32, #tpu.memory_space<vmem>>, vector<1x1x8x4xf32>
    %37 = vector.shape_cast %36 : vector<1x1x8x4xf32> to vector<8x4xf32>
    %cst_31 = arith.constant dense<0.000000e+00> : vector<8x128xf32>
    %38 = tpu.matmul %37, %35, %cst_31 {dimension_numbers = #tpu.dot_dimension_numbers<[1], [0], [0], [1], [0, 0, 1, 1], [], []>} : vector<8x4xf32>, vector<4x128xf32>, vector<8x128xf32> -> vector<8x128xf32>
    %39 = arith.addf %30, %38 : vector<8x128xf32>
    %c1_i32_32 = arith.constant 1 : i32
    %40 = arith.addi %2, %c1_i32_32 : i32
    %c0_33 = arith.constant 0 : index
    %c0_34 = arith.constant 0 : index
    %41 = arith.index_cast %40 : i32 to index
    %c1_35 = arith.constant 1 : index
    %42 = vector.load %arg2[%c0_33, %c0_34, %41, %c1_35] : memref<1x4x18x18xf32, #tpu.memory_space<vmem>>, vector<1x4x8x16xf32>
    %43 = vector.shape_cast %42 : vector<1x4x8x16xf32> to vector<4x8x16xf32>
    %44 = vector.shape_cast %43 : vector<4x8x16xf32> to vector<4x128xf32>
    %c1_36 = arith.constant 1 : index
    %c1_37 = arith.constant 1 : index
    %c0_38 = arith.constant 0 : index
    %c0_39 = arith.constant 0 : index
    %45 = vector.load %arg3[%c1_36, %c1_37, %c0_38, %c0_39] : memref<3x3x8x4xf32, #tpu.memory_space<vmem>>, vector<1x1x8x4xf32>
    %46 = vector.shape_cast %45 : vector<1x1x8x4xf32> to vector<8x4xf32>
    %cst_40 = arith.constant dense<0.000000e+00> : vector<8x128xf32>
    %47 = tpu.matmul %46, %44, %cst_40 {dimension_numbers = #tpu.dot_dimension_numbers<[1], [0], [0], [1], [0, 0, 1, 1], [], []>} : vector<8x4xf32>, vector<4x128xf32>, vector<8x128xf32> -> vector<8x128xf32>
    %48 = arith.addf %39, %47 : vector<8x128xf32>
    %c1_i32_41 = arith.constant 1 : i32
    %49 = arith.addi %2, %c1_i32_41 : i32
    %c0_42 = arith.constant 0 : index
    %c0_43 = arith.constant 0 : index
    %50 = arith.index_cast %49 : i32 to index
    %c2_44 = arith.constant 2 : index
    %51 = vector.load %arg2[%c0_42, %c0_43, %50, %c2_44] : memref<1x4x18x18xf32, #tpu.memory_space<vmem>>, vector<1x4x8x16xf32>
    %52 = vector.shape_cast %51 : vector<1x4x8x16xf32> to vector<4x8x16xf32>
    %53 = vector.shape_cast %52 : vector<4x8x16xf32> to vector<4x128xf32>
    %c1_45 = arith.constant 1 : index
    %c2_46 = arith.constant 2 : index
    %c0_47 = arith.constant 0 : index
    %c0_48 = arith.constant 0 : index
    %54 = vector.load %arg3[%c1_45, %c2_46, %c0_47, %c0_48] : memref<3x3x8x4xf32, #tpu.memory_space<vmem>>, vector<1x1x8x4xf32>
    %55 = vector.shape_cast %54 : vector<1x1x8x4xf32> to vector<8x4xf32>
    %cst_49 = arith.constant dense<0.000000e+00> : vector<8x128xf32>
    %56 = tpu.matmul %55, %53, %cst_49 {dimension_numbers = #tpu.dot_dimension_numbers<[1], [0], [0], [1], [0, 0, 1, 1], [], []>} : vector<8x4xf32>, vector<4x128xf32>, vector<8x128xf32> -> vector<8x128xf32>
    %57 = arith.addf %48, %56 : vector<8x128xf32>
    %c2_i32 = arith.constant 2 : i32
    %58 = arith.addi %2, %c2_i32 : i32
    %c0_50 = arith.constant 0 : index
    %c0_51 = arith.constant 0 : index
    %59 = arith.index_cast %58 : i32 to index
    %c0_52 = arith.constant 0 : index
    %60 = vector.load %arg2[%c0_50, %c0_51, %59, %c0_52] : memref<1x4x18x18xf32, #tpu.memory_space<vmem>>, vector<1x4x8x16xf32>
    %61 = vector.shape_cast %60 : vector<1x4x8x16xf32> to vector<4x8x16xf32>
    %62 = vector.shape_cast %61 : vector<4x8x16xf32> to vector<4x128xf32>
    %c2_53 = arith.constant 2 : index
    %c0_54 = arith.constant 0 : index
    %c0_55 = arith.constant 0 : index
    %c0_56 = arith.constant 0 : index
    %63 = vector.load %arg3[%c2_53, %c0_54, %c0_55, %c0_56] : memref<3x3x8x4xf32, #tpu.memory_space<vmem>>, vector<1x1x8x4xf32>
    %64 = vector.shape_cast %63 : vector<1x1x8x4xf32> to vector<8x4xf32>
    %cst_57 = arith.constant dense<0.000000e+00> : vector<8x128xf32>
    %65 = tpu.matmul %64, %62, %cst_57 {dimension_numbers = #tpu.dot_dimension_numbers<[1], [0], [0], [1], [0, 0, 1, 1], [], []>} : vector<8x4xf32>, vector<4x128xf32>, vector<8x128xf32> -> vector<8x128xf32>
    %66 = arith.addf %57, %65 : vector<8x128xf32>
    %c2_i32_58 = arith.constant 2 : i32
    %67 = arith.addi %2, %c2_i32_58 : i32
    %c0_59 = arith.constant 0 : index
    %c0_60 = arith.constant 0 : index
    %68 = arith.index_cast %67 : i32 to index
    %c1_61 = arith.constant 1 : index
    %69 = vector.load %arg2[%c0_59, %c0_60, %68, %c1_61] : memref<1x4x18x18xf32, #tpu.memory_space<vmem>>, vector<1x4x8x16xf32>
    %70 = vector.shape_cast %69 : vector<1x4x8x16xf32> to vector<4x8x16xf32>
    %71 = vector.shape_cast %70 : vector<4x8x16xf32> to vector<4x128xf32>
    %c2_62 = arith.constant 2 : index
    %c1_63 = arith.constant 1 : index
    %c0_64 = arith.constant 0 : index
    %c0_65 = arith.constant 0 : index
    %72 = vector.load %arg3[%c2_62, %c1_63, %c0_64, %c0_65] : memref<3x3x8x4xf32, #tpu.memory_space<vmem>>, vector<1x1x8x4xf32>
    %73 = vector.shape_cast %72 : vector<1x1x8x4xf32> to vector<8x4xf32>
    %cst_66 = arith.constant dense<0.000000e+00> : vector<8x128xf32>
    %74 = tpu.matmul %73, %71, %cst_66 {dimension_numbers = #tpu.dot_dimension_numbers<[1], [0], [0], [1], [0, 0, 1, 1], [], []>} : vector<8x4xf32>, vector<4x128xf32>, vector<8x128xf32> -> vector<8x128xf32>
    %75 = arith.addf %66, %74 : vector<8x128xf32>
    %c2_i32_67 = arith.constant 2 : i32
    %76 = arith.addi %2, %c2_i32_67 : i32
    %c0_68 = arith.constant 0 : index
    %c0_69 = arith.constant 0 : index
    %77 = arith.index_cast %76 : i32 to index
    %c2_70 = arith.constant 2 : index
    %78 = vector.load %arg2[%c0_68, %c0_69, %77, %c2_70] : memref<1x4x18x18xf32, #tpu.memory_space<vmem>>, vector<1x4x8x16xf32>
    %79 = vector.shape_cast %78 : vector<1x4x8x16xf32> to vector<4x8x16xf32>
    %80 = vector.shape_cast %79 : vector<4x8x16xf32> to vector<4x128xf32>
    %c2_71 = arith.constant 2 : index
    %c2_72 = arith.constant 2 : index
    %c0_73 = arith.constant 0 : index
    %c0_74 = arith.constant 0 : index
    %81 = vector.load %arg3[%c2_71, %c2_72, %c0_73, %c0_74] : memref<3x3x8x4xf32, #tpu.memory_space<vmem>>, vector<1x1x8x4xf32>
    %82 = vector.shape_cast %81 : vector<1x1x8x4xf32> to vector<8x4xf32>
    %cst_75 = arith.constant dense<0.000000e+00> : vector<8x128xf32>
    %83 = tpu.matmul %82, %80, %cst_75 {dimension_numbers = #tpu.dot_dimension_numbers<[1], [0], [0], [1], [0, 0, 1, 1], [], []>} : vector<8x4xf32>, vector<4x128xf32>, vector<8x128xf32> -> vector<8x128xf32>
    %84 = arith.addf %75, %83 : vector<8x128xf32>
    %c0_76 = arith.constant 0 : index
    %c0_77 = arith.constant 0 : index
    %85 = vector.load %arg4[%c0_76, %c0_77] : memref<8x1xf32, #tpu.memory_space<vmem>>, vector<8x1xf32>
    %86 = vector.broadcast %85 : vector<8x1xf32> to vector<8x128xf32>
    %87 = arith.addf %84, %86 : vector<8x128xf32>
    %c0_78 = arith.constant 0 : index
    %c0_79 = arith.constant 0 : index
    %c0_80 = arith.constant 0 : index
    %88 = vector.load %arg5[%c0_78, %c0_79, %c0_80] : memref<1x8x128xf32, #tpu.memory_space<vmem>>, vector<1x8x128xf32>
    %89 = vector.shape_cast %88 : vector<1x8x128xf32> to vector<8x128xf32>
    %90 = vector.shape_cast %87 : vector<8x128xf32> to vector<1x8x128xf32>
    tpu.vector_store %arg5[%c0_78, %c0_79, %c0_80], %90 {strides = array<i32>} : memref<1x8x128xf32, #tpu.memory_space<vmem>>, vector<1x8x128xf32>,
    return
  }
  func.func @transform_0(%arg0: i32, %arg1: i32) -> (i32, i32, i32, i32) {
    %c0_i32 = arith.constant 0 : i32
    %c0_i32_0 = arith.constant 0 : i32
    %c0_i32_1 = arith.constant 0 : i32
    %c0_i32_2 = arith.constant 0 : i32
    return %arg0, %c0_i32, %c0_i32_0, %c0_i32_1 : i32, i32, i32, i32
  }
  func.func @transform_1(%arg0: i32, %arg1: i32) -> (i32, i32, i32, i32) {
    %c0_i32 = arith.constant 0 : i32
    %c0_i32_0 = arith.constant 0 : i32
    %c0_i32_1 = arith.constant 0 : i32
    %c0_i32_2 = arith.constant 0 : i32
    %c0_i32_3 = arith.constant 0 : i32
    return %c0_i32, %c0_i32_0, %c0_i32_1, %c0_i32_2 : i32, i32, i32, i32
  }
  func.func @transform_2(%arg0: i32, %arg1: i32) -> (i32, i32) {
    %c0_i32 = arith.constant 0 : i32
    %c0_i32_0 = arith.constant 0 : i32
    %c0_i32_1 = arith.constant 0 : i32
    return %c0_i32, %c0_i32_0 : i32, i32
  }
  func.func @transform_3(%arg0: i32, %arg1: i32) -> (i32, i32, i32) {
    %c0_i32 = arith.constant 0 : i32
    %c0_i32_0 = arith.constant 0 : i32
    return %arg0, %c0_i32, %arg1 : i32, i32, i32
  }
}

</mosaic_0001>

<llo_original>
// kernel: tpu_custom_call.1
$region0: #{tpu_custom_call.1}
  #allocation0 [shape = 'u32[]', space=smem, size = 0x4, offset = 0x4, fixed_abs, tag = 'smem constant byte address 0x4 - core index']
  #allocation1 [shape = 'u32[144,128]{1,0:T(1,128)}', space=vmem, size = 0x12000, scoped, tag = 'internal scratch']
  %s0 = inlined_call_operand.vmem [shape: f32[2,4,18,18], index: 0, kind: input, shape index: {}]
  %s1 = inlined_call_operand.vmem [shape: f32[3,3,8,4], index: 1, kind: input, shape index: {}]
  %s2 = inlined_call_operand.vmem [shape: f32[8,1], index: 2, kind: input, shape index: {}]
  %s3 = inlined_call_operand.hbm [shape: f32[2,8,256], index: 3, kind: output, shape index: {}]
  %s4 = sld [smem:[#allocation0]]
  $region45: #{tpu_custom_call.1} parent=0
    _
  %s6 = ssub.s32 1, %s4
  %s7 = scalar_select 0, %s6, %s4
  $region1: #{tpu_custom_call.1} parent=0
    #allocation2 [shape = 'u8[8192]{0}', space=vmem, size = 0x2000, scoped, tag = 'output window, operand 0']
    #allocation3 [shape = 's32[2]{0}', space=sflag, size = 0x8, scoped, tag = 'scoped memory for tpu_custom_call.1']
    %8 = vsyncpa [#allocation3], 0
    %s9 = scalar_lea.sflag [#allocation3], 1
    %10 = vsyncpa %s9, 0
    loop: start=0, step=1, limit=6
    $region2: #{tpu_custom_call.1} parent=1 // loop_pre_header
      _
    $region3: #{tpu_custom_call.1} parent=1 // loop_header
      %s12 = sphi 0, %s16
      %p13 = scmp.ge.s32.totalorder %s12, 6
      %s19 = sphi 0, %s31
      %s20 = sphi 0, %s27
      %s21 = sphi 0, %s19
      %s22 = sphi 0, %s20
      %s23 = sphi 0, %s21
      %s24 = sphi 0, %s22
      %s34 = sphi 0, %s36
      %s37 = sphi 0, %s34
      %s38 = sphi 0, %s37
      %s54 = sphi 0, %s38
      %s58 = sphi 0, %s58
      %s60 = sphi 0, %s58
      %s61 = sphi 0, %s60
      %s75 = sphi 0, %s61
      %s79 = sphi 0, %s79
      %s81 = sphi 0, %s79
      %s82 = sphi 0, %s81
      %s96 = sphi 0, %s82
      %s104 = sphi 0, %s106
      %s107 = sphi 0, %s104
      %s108 = sphi 0, %s107
      %s124 = sphi 0, %s108
    $region4: #{tpu_custom_call.1} parent=1 // loop_header_branch
      %15 = sbr.rel (%p13) target = $region8
    $region5: #{tpu_custom_call.1} parent=1 // loop_body
      %s17 = ssub.s32 %s12, 1
      %s18 = ssub.s32 %s12, 2
      %s25 = sadd.s32 1, %s20
      %p26 = scmp.ge.s32.totalorder %s25, 2
      %s27 = scalar_select %p26, 0, %s25
      %s28 = sadd.s32 1, %s19
      %s29 = scalar_select %p26, %s28, %s19
      %p30 = scmp.ge.s32.totalorder %s29, 2
      %s31 = scalar_select %p30, 0, %s29
      %s32 = ssub.s32 %s19, %s31
      %p33 = scmp.eq.s32.totalorder %s32, 0
      %s35 = sadd.s32 %s34, 1
      %s36 = scalar_select %p33, %s34, %s35
      %p39 = pneg %p33
      %p40 = scmp.eq.s32.totalorder %s12, 3
      %p41 = por %p39, %p40
      %p42 = scmp.ne.s32.totalorder %s34, %s37
      %p43 = scmp.eq.s32.totalorder %s12, 0
      %p44 = por %p42, %p43
      %p45 = scmp.ne.s32.totalorder %s34, %s37
      %p46 = scmp.eq.s32.totalorder %s17, 3
      %p47 = por %p45, %p46
      %p48 = scmp.ne.s32.totalorder %s37, %s38
      %p49 = scmp.eq.s32.totalorder %s17, 0
      %p50 = por %p48, %p49
      %p51 = scmp.ne.s32.totalorder %s37, %s38
      %p52 = scmp.eq.s32.totalorder %s18, 3
      %p53 = por %p51, %p52
      %p55 = scmp.ne.s32.totalorder %s38, %s54
      %p56 = scmp.eq.s32.totalorder %s18, 0
      %p57 = por %p55, %p56
      %s59 = sadd.s32 %s58, 1
      %p62 = scmp.eq.s32.totalorder %s12, 3
      %p63 = scmp.ne.s32.totalorder %s58, %s60
      %p64 = scmp.eq.s32.totalorder %s12, 0
      %p65 = por %p63, %p64
      %p66 = scmp.ne.s32.totalorder %s58, %s60
      %p67 = scmp.eq.s32.totalorder %s17, 3
      %p68 = por %p66, %p67
      %p69 = scmp.ne.s32.totalorder %s60, %s61
      %p70 = scmp.eq.s32.totalorder %s17, 0
      %p71 = por %p69, %p70
      %p72 = scmp.ne.s32.totalorder %s60, %s61
      %p73 = scmp.eq.s32.totalorder %s18, 3
      %p74 = por %p72, %p73
      %p76 = scmp.ne.s32.totalorder %s61, %s75
      %p77 = scmp.eq.s32.totalorder %s18, 0
      %p78 = por %p76, %p77
      %s80 = sadd.s32 %s79, 1
      %p83 = scmp.eq.s32.totalorder %s12, 3
      %p84 = scmp.ne.s32.totalorder %s79, %s81
      %p85 = scmp.eq.s32.totalorder %s12, 0
      %p86 = por %p84, %p85
      %p87 = scmp.ne.s32.totalorder %s79, %s81
      %p88 = scmp.eq.s32.totalorder %s17, 3
      %p89 = por %p87, %p88
      %p90 = scmp.ne.s32.totalorder %s81, %s82
      %p91 = scmp.eq.s32.totalorder %s17, 0
      %p92 = por %p90, %p91
      %p93 = scmp.ne.s32.totalorder %s81, %s82
      %p94 = scmp.eq.s32.totalorder %s18, 3
      %p95 = por %p93, %p94
      %p97 = scmp.ne.s32.totalorder %s82, %s96
      %p98 = scmp.eq.s32.totalorder %s18, 0
      %p99 = por %p97, %p98
      %s100 = ssub.s32 %s19, %s31
      %s101 = ssub.s32 %s20, %s27
      %s102 = sor.u32 %s100, %s101
      %p103 = scmp.eq.s32.totalorder %s102, 0
      %s105 = sadd.s32 %s104, 1
      %s106 = scalar_select %p103, %s104, %s105
      %p109 = pneg %p103
      %p110 = scmp.eq.s32.totalorder %s12, 3
      %p111 = por %p109, %p110
      %p112 = scmp.ne.s32.totalorder %s104, %s107
      %p113 = scmp.eq.s32.totalorder %s12, 0
      %p114 = por %p112, %p113
      %p115 = scmp.ne.s32.totalorder %s104, %s107
      %p116 = scmp.eq.s32.totalorder %s17, 3
      %p117 = por %p115, %p116
      %p118 = scmp.ne.s32.totalorder %s107, %s108
      %p119 = scmp.eq.s32.totalorder %s17, 0
      %p120 = por %p118, %p119
      %p121 = scmp.ne.s32.totalorder %s107, %s108
      %p122 = scmp.eq.s32.totalorder %s18, 3
      %p123 = por %p121, %p122
      %p125 = scmp.ne.s32.totalorder %s108, %s124
      %p126 = scmp.eq.s32.totalorder %s18, 0
      %p127 = por %p125, %p126
      %p128 = scmp.le.s32.totalorder 1, %s12
      %p129 = scmp.lt.s32.totalorder %s12, 5
      %p130 = pnand %p128, %p129
      %p131 = pneg %p130
      // Predicated region
      $region9: #{tpu_custom_call.1} parent=5 // pred_check
        _
      $region10: #{tpu_custom_call.1} parent=5 // pred_check_branch
        %133 = sbr.rel (%p130) target = $region12
      $region11: #{tpu_custom_call.1} parent=5 // pred_region
        %s134 = ssub.s32 %s12, 1
        // Predicated region
        $region13: #{tpu_custom_call.1} parent=11 // pred_check
          %p135 = pneg %p71
        $region14: #{tpu_custom_call.1} parent=11 // pred_check_branch
          %137 = sbr.rel (%p135) target = $region16
        $region15: #{tpu_custom_call.1} parent=11 // pred_region
          _
        $region16: #{tpu_custom_call.1} parent=11 // pred_fallthru
          _
        // Predicated region
        $region17: #{tpu_custom_call.1} parent=11 // pred_check
          %p138 = pneg %p92
        $region18: #{tpu_custom_call.1} parent=11 // pred_check_branch
          %140 = sbr.rel (%p138) target = $region20
        $region19: #{tpu_custom_call.1} parent=11 // pred_region
          _
        $region20: #{tpu_custom_call.1} parent=11 // pred_fallthru
          _
      $region12: #{tpu_custom_call.1} parent=5 // pred_fallthru
        _
      %p141 = scmp.lt.s32.totalorder %s12, 4
      // Predicated region
      $region21: #{tpu_custom_call.1} parent=5 // pred_check
        %p142 = pneg %p141
      $region22: #{tpu_custom_call.1} parent=5 // pred_check_branch
        %144 = sbr.rel (%p142) target = $region24
      $region23: #{tpu_custom_call.1} parent=5 // pred_region
        // Predicated region
        $region25: #{tpu_custom_call.1} parent=23 // pred_check
          %p145 = pneg %p44
        $region26: #{tpu_custom_call.1} parent=23 // pred_check_branch
          %147 = sbr.rel (%p145) target = $region28
        $region27: #{tpu_custom_call.1} parent=23 // pred_region
          %p148 = scmp.lt.s32.totalorder %s19, 1
          %s149 = scalar_select %p148, %s19, 1
          %s150 = smul.addr %s149, 12
          %s151 = smul.addr %s150, 8
          %s152 = scalar_lea.vmem %s0, %s151
        $region28: #{tpu_custom_call.1} parent=23 // pred_fallthru
          _
      $region24: #{tpu_custom_call.1} parent=5 // pred_fallthru
        _
      %p153 = scmp.le.s32.totalorder 1, %s12
      %p154 = scmp.lt.s32.totalorder %s12, 5
      %p155 = pnand %p153, %p154
      %p156 = pneg %p155
      // Predicated region
      $region29: #{tpu_custom_call.1} parent=5 // pred_check
        _
      $region30: #{tpu_custom_call.1} parent=5 // pred_check_branch
        %158 = sbr.rel (%p155) target = $region32
      $region31: #{tpu_custom_call.1} parent=5 // pred_region
        %s159 = ssub.s32 %s12, 1
        %p160 = scmp.lt.s32.totalorder %s21, 1
        %s161 = scalar_select %p160, %s21, 1
        %s162 = smul.addr %s161, 12
        %s163 = smul.addr %s162, 8
        %s164 = scalar_lea.vmem %s0, %s163
        %p165 = pneg %p50
        %p166 = pneg %p47
        %p167 = pneg %p71
        %p168 = pneg %p68
        %p169 = pneg %p92
        %p170 = pneg %p89
        %p171 = pneg %p120
        %p172 = pneg %p117
        %s173 = sand.u32 %s107, 1
        %s174 = scalar_lea.sflag [#allocation3], %s173
        %s175 = sand.u32 %s107, 1
        %s176 = smul.addr %s175, 8
        %s177 = scalar_lea.vmem [#allocation2], %s176
        %p178 = scmp.lt.s32.totalorder %s21, 1
        %s179 = scalar_select %p178, %s21, 1
        %s180 = smul.addr %s179, 12
        %s181 = smul.addr %s180, 8
        %s182 = scalar_lea.vmem %s0, %s181
        %s183 = smul.u32 %s22, 8
        %s184 = scalar_lea.vmem %s182, %s183
        %v185 = vld [vmem:[%s184] sm:$0xff]
        %v186 = vld [vmem:[%s184 + $0x18] sm:$0xff]
        %v187 = vld [vmem:[%s184 + $0x30] sm:$0xff]
        %v188 = vld [vmem:[%s184 + $0x48] sm:$0xff]
        %v189 = vcombine.low %v185, %v187
        %v190 = vcombine.high %v185, %v187
        %v192 = vunpack.c.l.s4 1983009808
        %v193 = vunpack.c.0.s8 %v192
        %v194 = vlaneseq
        %v195 = vshrl.u32 %v194, 7
        %v196 = vsub.s32 %v193, %v195
        %v197 = vrot.slane %v189, %v196
        %v199 = vunpack.c.l.s4 1983009808
        %v200 = vunpack.c.0.s8 %v199
        %v201 = vlaneseq
        %v202 = vshrl.u32 %v201, 7
        %v203 = vsub.s32 %v200, %v202
        %v204 = vrot.slane %v190, %v203
        %v205 = vcombine.low %v186, %v188
        %v206 = vcombine.high %v186, %v188
        %v208 = vunpack.c.l.s4 1983009808
        %v209 = vunpack.c.0.s8 %v208
        %v210 = vlaneseq
        %v211 = vshrl.u32 %v210, 7
        %v212 = vsub.s32 %v209, %v211
        %v213 = vrot.slane %v205, %v212
        %v215 = vunpack.c.l.s4 1983009808
        %v216 = vunpack.c.0.s8 %v215
        %v217 = vlaneseq
        %v218 = vshrl.u32 %v217, 7
        %v219 = vsub.s32 %v216, %v218
        %v220 = vrot.slane %v206, %v219
        %v221 = vcombine.low %v197, %v213
        %v222 = vcombine.high %v197, %v213
        %v224 = vunpack.c.l.s4 1934713408
        %v225 = vunpack.c.0.s8 %v224
        %v226 = vlaneseq
        %v227 = vshrl.u32 %v226, 7
        %v228 = vsub.s32 %v225, %v227
        %v229 = vrot.slane %v221, %v228
        %v231 = vunpack.c.l.s4 1934713408
        %v232 = vunpack.c.0.s8 %v231
        %v233 = vlaneseq
        %v234 = vshrl.u32 %v233, 7
        %v235 = vsub.s32 %v232, %v234
        %v236 = vrot.slane %v222, %v235
        %v237 = vcombine.low %v204, %v220
        %v238 = vcombine.high %v204, %v220
        %v240 = vunpack.c.l.s4 1934713408
        %v241 = vunpack.c.0.s8 %v240
        %v242 = vlaneseq
        %v243 = vshrl.u32 %v242, 7
        %v244 = vsub.s32 %v241, %v243
        %v245 = vrot.slane %v237, %v244
        %v247 = vunpack.c.l.s4 1934713408
        %v248 = vunpack.c.0.s8 %v247
        %v249 = vlaneseq
        %v250 = vshrl.u32 %v249, 7
        %v251 = vsub.s32 %v248, %v250
        %v252 = vrot.slane %v238, %v251
        %v253 = vcombine.high %v229, 0.0
        %v254 = vcombine.high %v236, 0.0
        %v255 = vcombine.high %v245, 0.0
        %v256 = vcombine.high %v252, 0.0
        %258 = vrot.lane.b32.xlu0 %v253, 16
        %v259 = vpop.permute.xlu0 %258
        %262 = vrot.lane.b32.xlu0 %v236, 32
        %v263 = vpop.permute.xlu0 %262
        %266 = vrot.lane.b32.xlu0 %v254, 48
        %v267 = vpop.permute.xlu0 %266
        %270 = vrot.lane.b32.xlu0 %v245, 64
        %v271 = vpop.permute.xlu0 %270
        %274 = vrot.lane.b32.xlu0 %v255, 80
        %v275 = vpop.permute.xlu0 %274
        %278 = vrot.lane.b32.xlu0 %v252, 96
        %v279 = vpop.permute.xlu0 %278
        %282 = vrot.lane.b32.xlu0 %v256, 112
        %v283 = vpop.permute.xlu0 %282
        %vm285 = vcmask 130048
        %v286 = vsel %vm285, %v229, %v259
        %vm287 = vcmask 261120
        %v288 = vsel %vm287, %v286, %v263
        %vm289 = vcmask 392192
        %v290 = vsel %vm289, %v288, %v267
        %vm291 = vcmask 523264
        %v292 = vsel %vm291, %v290, %v271
        %vm293 = vcmask 654336
        %v294 = vsel %vm293, %v292, %v275
        %vm295 = vcmask 785408
        %v296 = vsel %vm295, %v294, %v279
        %vm297 = vcmask 916480
        %v298 = vsel %vm297, %v296, %v283
        %v299 = vld [vmem:[%s1] sm:$0xff]
        %304 = vrot.lane.b32.xlu0 %v185, 127
        %v305 = vpop.permute.xlu0 %304
        %306 = vrot.lane.b32.xlu0 %v186, 127
        %v307 = vpop.permute.xlu0 %306
        %308 = vrot.lane.b32.xlu0 %v187, 127
        %v309 = vpop.permute.xlu0 %308
        %310 = vrot.lane.b32.xlu0 %v188, 127
        %v311 = vpop.permute.xlu0 %310
        %v316 = vcombine.low %v305, %v309
        %v317 = vcombine.high %v305, %v309
        %v319 = vunpack.c.l.s4 1983009808
        %v320 = vunpack.c.0.s8 %v319
        %v321 = vlaneseq
        %v322 = vshrl.u32 %v321, 7
        %v323 = vsub.s32 %v320, %v322
        %v324 = vrot.slane %v316, %v323
        %v326 = vunpack.c.l.s4 1983009808
        %v327 = vunpack.c.0.s8 %v326
        %v328 = vlaneseq
        %v329 = vshrl.u32 %v328, 7
        %v330 = vsub.s32 %v327, %v329
        %v331 = vrot.slane %v317, %v330
        %v332 = vcombine.low %v307, %v311
        %v333 = vcombine.high %v307, %v311
        %v335 = vunpack.c.l.s4 1983009808
        %v336 = vunpack.c.0.s8 %v335
        %v337 = vlaneseq
        %v338 = vshrl.u32 %v337, 7
        %v339 = vsub.s32 %v336, %v338
        %v340 = vrot.slane %v332, %v339
        %v342 = vunpack.c.l.s4 1983009808
        %v343 = vunpack.c.0.s8 %v342
        %v344 = vlaneseq
        %v345 = vshrl.u32 %v344, 7
        %v346 = vsub.s32 %v343, %v345
        %v347 = vrot.slane %v333, %v346
        %v348 = vcombine.low %v324, %v340
        %v349 = vcombine.high %v324, %v340
        %v351 = vunpack.c.l.s4 1934713408
        %v352 = vunpack.c.0.s8 %v351
        %v353 = vlaneseq
        %v354 = vshrl.u32 %v353, 7
        %v355 = vsub.s32 %v352, %v354
        %v356 = vrot.slane %v348, %v355
        %v358 = vunpack.c.l.s4 1934713408
        %v359 = vunpack.c.0.s8 %v358
        %v360 = vlaneseq
        %v361 = vshrl.u32 %v360, 7
        %v362 = vsub.s32 %v359, %v361
        %v363 = vrot.slane %v349, %v362
        %v364 = vcombine.low %v331, %v347
        %v365 = vcombine.high %v331, %v347
        %v367 = vunpack.c.l.s4 1934713408
        %v368 = vunpack.c.0.s8 %v367
        %v369 = vlaneseq
        %v370 = vshrl.u32 %v369, 7
        %v371 = vsub.s32 %v368, %v370
        %v372 = vrot.slane %v364, %v371
        %v374 = vunpack.c.l.s4 1934713408
        %v375 = vunpack.c.0.s8 %v374
        %v376 = vlaneseq
        %v377 = vshrl.u32 %v376, 7
        %v378 = vsub.s32 %v375, %v377
        %v379 = vrot.slane %v365, %v378
        %v380 = vcombine.high %v356, 0.0
        %v381 = vcombine.high %v363, 0.0
        %v382 = vcombine.high %v372, 0.0
        %v383 = vcombine.high %v379, 0.0
        %385 = vrot.lane.b32.xlu0 %v380, 16
        %v386 = vpop.permute.xlu0 %385
        %389 = vrot.lane.b32.xlu0 %v363, 32
        %v390 = vpop.permute.xlu0 %389
        %393 = vrot.lane.b32.xlu0 %v381, 48
        %v394 = vpop.permute.xlu0 %393
        %397 = vrot.lane.b32.xlu0 %v372, 64
        %v398 = vpop.permute.xlu0 %397
        %401 = vrot.lane.b32.xlu0 %v382, 80
        %v402 = vpop.permute.xlu0 %401
        %405 = vrot.lane.b32.xlu0 %v379, 96
        %v406 = vpop.permute.xlu0 %405
        %409 = vrot.lane.b32.xlu0 %v383, 112
        %v410 = vpop.permute.xlu0 %409
        %v412 = vsel %vm285, %v356, %v386
        %v413 = vsel %vm287, %v412, %v390
        %v414 = vsel %vm289, %v413, %v394
        %v415 = vsel %vm291, %v414, %v398
        %v416 = vsel %vm293, %v415, %v402
        %v417 = vsel %vm295, %v416, %v406
        %v418 = vsel %vm297, %v417, %v410
        %s419 = scalar_lea.vmem %s1, 8
        %v420 = vld [vmem:[%s419] sm:$0xff]
        %vm421 = vcmask 31744
        %v423 = vsel %vm421, %v420, 0
        %vm425 = vcmask 1043456
        %v427 = vsel %vm425, %v418, 0
        %429 = vmatprep.subr.mxu0 0.0
        %430 = vmatpush1.msra.mxu0 %v427
        %431 = vmatprep.subr.mxu0 0.0
        %432 = vmatpush1.msra.mxu0 0.0
        %433 = vmatprep.subr.mxu0 0.0
        %434 = vmatpush1.msra.mxu0 0.0
        %435 = vmatprep.subr.mxu0 0.0
        %436 = vmatpush1.msra.mxu0 0.0
        %437 = vmatprep.subr.mxu0 0.0
        %438 = vmatpush1.msra.mxu0 0.0
        %439 = vmatprep.subr.mxu0 0.0
        %440 = vmatpush1.msra.mxu0 0.0
        %441 = vmatprep.subr.mxu0 0.0
        %442 = vmatpush1.msra.mxu0 0.0
        %443 = vmatprep.subr.mxu0 0.0
        %444 = vmatpush1.msra.mxu0 0.0
        %445 = vmatprep.subr.mxu0 0.0
        %446 = vmatpush1.msra.mxu0 0.0
        %447 = vmatprep.subr.mxu0 0.0
        %448 = vmatpush1.msra.mxu0 0.0
        %449 = vmatprep.subr.mxu0 0.0
        %450 = vmatpush1.msra.mxu0 0.0
        %451 = vmatprep.subr.mxu0 0.0
        %452 = vmatpush1.msra.mxu0 0.0
        %453 = vmatprep.subr.mxu0 0.0
        %454 = vmatpush1.msra.mxu0 0.0
        %455 = vmatprep.subr.mxu0 0.0
        %456 = vmatpush1.msra.mxu0 0.0
        %457 = vmatprep.subr.mxu0 0.0
        %458 = vmatpush1.msra.mxu0 0.0
        %459 = vmatprep.subr.mxu0 0.0
        %460 = vmatpush1.msra.mxu0 0.0
        %461 = vmatprep.subr.mxu0 0.0
        %462 = vmatpush1.msra.mxu0 0.0
        %463 = vmatprep.subr.mxu0 0.0
        %464 = vmatpush1.msra.mxu0 0.0
        %465 = vmatprep.subr.mxu0 0.0
        %466 = vmatpush1.msra.mxu0 0.0
        %467 = vmatprep.subr.mxu0 0.0
        %468 = vmatpush1.msra.mxu0 0.0
        %469 = vmatprep.subr.mxu0 0.0
        %470 = vmatpush1.msra.mxu0 0.0
        %471 = vmatprep.subr.mxu0 0.0
        %472 = vmatpush1.msra.mxu0 0.0
        %473 = vmatprep.subr.mxu0 0.0
        %474 = vmatpush1.msra.mxu0 0.0
        %475 = vmatprep.subr.mxu0 0.0
        %476 = vmatpush1.msra.mxu0 0.0
        %477 = vmatprep.subr.mxu0 0.0
        %478 = vmatpush1.msra.mxu0 0.0
        %479 = vmatprep.subr.mxu0 0.0
        %480 = vmatpush1.msra.mxu0 0.0
        %481 = vmatprep.subr.mxu0 0.0
        %482 = vmatpush1.msra.mxu0 0.0
        %483 = vmatprep.subr.mxu0 0.0
        %484 = vmatpush1.msra.mxu0 0.0
        %485 = vmatprep.subr.mxu0 0.0
        %486 = vmatpush1.msra.mxu0 0.0
        %487 = vmatprep.subr.mxu0 0.0
        %488 = vmatpush1.msra.mxu0 0.0
        %489 = vmatprep.subr.mxu0 0.0
        %490 = vmatpush1.msra.mxu0 0.0
        %491 = vmatprep.subr.mxu0 0.0
        %492 = vmatpush1.msra.mxu0 0.0
        %493 = vmatprep.mubr.f32.mxu0 0.0
        %494 = vmatmul.mubr.f32.gmra.mrb[0].mxu0 %v423
        %v495 = vpop.f32.mrb[0].mxu0
        %v496 = vadd.f32 0.0, %v495
        %v497 = vpop.f32.mrb[0].mxu0
        %498 = vdwg.mxu0
        %v500 = vsel %vm421, %v299, 0
        %v503 = vsel %vm425, %v298, 0
        %505 = vmatprep.subr.mxu0 0.0
        %506 = vmatpush1.msra.mxu0 %v503
        %507 = vmatprep.subr.mxu0 0.0
        %508 = vmatpush1.msra.mxu0 0.0
        %509 = vmatprep.subr.mxu0 0.0
        %510 = vmatpush1.msra.mxu0 0.0
        %511 = vmatprep.subr.mxu0 0.0
        %512 = vmatpush1.msra.mxu0 0.0
        %513 = vmatprep.subr.mxu0 0.0
        %514 = vmatpush1.msra.mxu0 0.0
        %515 = vmatprep.subr.mxu0 0.0
        %516 = vmatpush1.msra.mxu0 0.0
        %517 = vmatprep.subr.mxu0 0.0
        %518 = vmatpush1.msra.mxu0 0.0
        %519 = vmatprep.subr.mxu0 0.0
        %520 = vmatpush1.msra.mxu0 0.0
        %521 = vmatprep.subr.mxu0 0.0
        %522 = vmatpush1.msra.mxu0 0.0
        %523 = vmatprep.subr.mxu0 0.0
        %524 = vmatpush1.msra.mxu0 0.0
        %525 = vmatprep.subr.mxu0 0.0
        %526 = vmatpush1.msra.mxu0 0.0
        %527 = vmatprep.subr.mxu0 0.0
        %528 = vmatpush1.msra.mxu0 0.0
        %529 = vmatprep.subr.mxu0 0.0
        %530 = vmatpush1.msra.mxu0 0.0
        %531 = vmatprep.subr.mxu0 0.0
        %532 = vmatpush1.msra.mxu0 0.0
        %533 = vmatprep.subr.mxu0 0.0
        %534 = vmatpush1.msra.mxu0 0.0
        %535 = vmatprep.subr.mxu0 0.0
        %536 = vmatpush1.msra.mxu0 0.0
        %537 = vmatprep.subr.mxu0 0.0
        %538 = vmatpush1.msra.mxu0 0.0
        %539 = vmatprep.subr.mxu0 0.0
        %540 = vmatpush1.msra.mxu0 0.0
        %541 = vmatprep.subr.mxu0 0.0
        %542 = vmatpush1.msra.mxu0 0.0
        %543 = vmatprep.subr.mxu0 0.0
        %544 = vmatpush1.msra.mxu0 0.0
        %545 = vmatprep.subr.mxu0 0.0
        %546 = vmatpush1.msra.mxu0 0.0
        %547 = vmatprep.subr.mxu0 0.0
        %548 = vmatpush1.msra.mxu0 0.0
        %549 = vmatprep.subr.mxu0 0.0
        %550 = vmatpush1.msra.mxu0 0.0
        %551 = vmatprep.subr.mxu0 0.0
        %552 = vmatpush1.msra.mxu0 0.0
        %553 = vmatprep.subr.mxu0 0.0
        %554 = vmatpush1.msra.mxu0 0.0
        %555 = vmatprep.subr.mxu0 0.0
        %556 = vmatpush1.msra.mxu0 0.0
        %557 = vmatprep.subr.mxu0 0.0
        %558 = vmatpush1.msra.mxu0 0.0
        %559 = vmatprep.subr.mxu0 0.0
        %560 = vmatpush1.msra.mxu0 0.0
        %561 = vmatprep.subr.mxu0 0.0
        %562 = vmatpush1.msra.mxu0 0.0
        %563 = vmatprep.subr.mxu0 0.0
        %564 = vmatpush1.msra.mxu0 0.0
        %565 = vmatprep.subr.mxu0 0.0
        %566 = vmatpush1.msra.mxu0 0.0
        %567 = vmatprep.subr.mxu0 0.0
        %568 = vmatpush1.msra.mxu0 0.0
        %569 = vmatprep.mubr.f32.mxu0 0.0
        %570 = vmatmul.mubr.f32.gmra.mrb[0].mxu0 %v500
        %v571 = vpop.f32.mrb[0].mxu0
        %v572 = vadd.f32 %v496, %v571
        %v573 = vpop.f32.mrb[0].mxu0
        %574 = vdwg.mxu0
        %v575 = vld [vmem:[%s184] sm:$0xff]
        %v576 = vld [vmem:[%s184 + $0x18] sm:$0xff]
        %v577 = vld [vmem:[%s184 + $0x30] sm:$0xff]
        %v578 = vld [vmem:[%s184 + $0x48] sm:$0xff]
        %583 = vrot.lane.b32.xlu0 %v575, 126
        %v584 = vpop.permute.xlu0 %583
        %585 = vrot.lane.b32.xlu0 %v576, 126
        %v586 = vpop.permute.xlu0 %585
        %587 = vrot.lane.b32.xlu0 %v577, 126
        %v588 = vpop.permute.xlu0 %587
        %589 = vrot.lane.b32.xlu0 %v578, 126
        %v590 = vpop.permute.xlu0 %589
        %v595 = vcombine.low %v584, %v588
        %v596 = vcombine.high %v584, %v588
        %v598 = vunpack.c.l.s4 1983009808
        %v599 = vunpack.c.0.s8 %v598
        %v600 = vlaneseq
        %v601 = vshrl.u32 %v600, 7
        %v602 = vsub.s32 %v599, %v601
        %v603 = vrot.slane %v595, %v602
        %v605 = vunpack.c.l.s4 1983009808
        %v606 = vunpack.c.0.s8 %v605
        %v607 = vlaneseq
        %v608 = vshrl.u32 %v607, 7
        %v609 = vsub.s32 %v606, %v608
        %v610 = vrot.slane %v596, %v609
        %v611 = vcombine.low %v586, %v590
        %v612 = vcombine.high %v586, %v590
        %v614 = vunpack.c.l.s4 1983009808
        %v615 = vunpack.c.0.s8 %v614
        %v616 = vlaneseq
        %v617 = vshrl.u32 %v616, 7
        %v618 = vsub.s32 %v615, %v617
        %v619 = vrot.slane %v611, %v618
        %v621 = vunpack.c.l.s4 1983009808
        %v622 = vunpack.c.0.s8 %v621
        %v623 = vlaneseq
        %v624 = vshrl.u32 %v623, 7
        %v625 = vsub.s32 %v622, %v624
        %v626 = vrot.slane %v612, %v625
        %v627 = vcombine.low %v603, %v619
        %v628 = vcombine.high %v603, %v619
        %v630 = vunpack.c.l.s4 1934713408
        %v631 = vunpack.c.0.s8 %v630
        %v632 = vlaneseq
        %v633 = vshrl.u32 %v632, 7
        %v634 = vsub.s32 %v631, %v633
        %v635 = vrot.slane %v627, %v634
        %v637 = vunpack.c.l.s4 1934713408
        %v638 = vunpack.c.0.s8 %v637
        %v639 = vlaneseq
        %v640 = vshrl.u32 %v639, 7
        %v641 = vsub.s32 %v638, %v640
        %v642 = vrot.slane %v628, %v641
        %v643 = vcombine.low %v610, %v626
        %v644 = vcombine.high %v610, %v626
        %v646 = vunpack.c.l.s4 1934713408
        %v647 = vunpack.c.0.s8 %v646
        %v648 = vlaneseq
        %v649 = vshrl.u32 %v648, 7
        %v650 = vsub.s32 %v647, %v649
        %v651 = vrot.slane %v643, %v650
        %v653 = vunpack.c.l.s4 1934713408
        %v654 = vunpack.c.0.s8 %v653
        %v655 = vlaneseq
        %v656 = vshrl.u32 %v655, 7
        %v657 = vsub.s32 %v654, %v656
        %v658 = vrot.slane %v644, %v657
        %v659 = vcombine.high %v635, 0.0
        %v660 = vcombine.high %v642, 0.0
        %v661 = vcombine.high %v651, 0.0
        %v662 = vcombine.high %v658, 0.0
        %664 = vrot.lane.b32.xlu0 %v659, 16
        %v665 = vpop.permute.xlu0 %664
        %668 = vrot.lane.b32.xlu0 %v642, 32
        %v669 = vpop.permute.xlu0 %668
        %672 = vrot.lane.b32.xlu0 %v660, 48
        %v673 = vpop.permute.xlu0 %672
        %676 = vrot.lane.b32.xlu0 %v651, 64
        %v677 = vpop.permute.xlu0 %676
        %680 = vrot.lane.b32.xlu0 %v661, 80
        %v681 = vpop.permute.xlu0 %680
        %684 = vrot.lane.b32.xlu0 %v658, 96
        %v685 = vpop.permute.xlu0 %684
        %688 = vrot.lane.b32.xlu0 %v662, 112
        %v689 = vpop.permute.xlu0 %688
        %v691 = vsel %vm285, %v635, %v665
        %v692 = vsel %vm287, %v691, %v669
        %v693 = vsel %vm289, %v692, %v673
        %v694 = vsel %vm291, %v693, %v677
        %v695 = vsel %vm293, %v694, %v681
        %v696 = vsel %vm295, %v695, %v685
        %v697 = vsel %vm297, %v696, %v689
        %s698 = scalar_lea.vmem %s1, 16
        %v699 = vld [vmem:[%s698] sm:$0xff]
        %v701 = vsel %vm421, %v699, 0
        %v704 = vsel %vm425, %v697, 0
        %706 = vmatprep.subr.mxu0 0.0
        %707 = vmatpush1.msra.mxu0 %v704
        %708 = vmatprep.subr.mxu0 0.0
        %709 = vmatpush1.msra.mxu0 0.0
        %710 = vmatprep.subr.mxu0 0.0
        %711 = vmatpush1.msra.mxu0 0.0
        %712 = vmatprep.subr.mxu0 0.0
        %713 = vmatpush1.msra.mxu0 0.0
        %714 = vmatprep.subr.mxu0 0.0
        %715 = vmatpush1.msra.mxu0 0.0
        %716 = vmatprep.subr.mxu0 0.0
        %717 = vmatpush1.msra.mxu0 0.0
        %718 = vmatprep.subr.mxu0 0.0
        %719 = vmatpush1.msra.mxu0 0.0
        %720 = vmatprep.subr.mxu0 0.0
        %721 = vmatpush1.msra.mxu0 0.0
        %722 = vmatprep.subr.mxu0 0.0
        %723 = vmatpush1.msra.mxu0 0.0
        %724 = vmatprep.subr.mxu0 0.0
        %725 = vmatpush1.msra.mxu0 0.0
        %726 = vmatprep.subr.mxu0 0.0
        %727 = vmatpush1.msra.mxu0 0.0
        %728 = vmatprep.subr.mxu0 0.0
        %729 = vmatpush1.msra.mxu0 0.0
        %730 = vmatprep.subr.mxu0 0.0
        %731 = vmatpush1.msra.mxu0 0.0
        %732 = vmatprep.subr.mxu0 0.0
        %733 = vmatpush1.msra.mxu0 0.0
        %734 = vmatprep.subr.mxu0 0.0
        %735 = vmatpush1.msra.mxu0 0.0
        %736 = vmatprep.subr.mxu0 0.0
        %737 = vmatpush1.msra.mxu0 0.0
        %738 = vmatprep.subr.mxu0 0.0
        %739 = vmatpush1.msra.mxu0 0.0
        %740 = vmatprep.subr.mxu0 0.0
        %741 = vmatpush1.msra.mxu0 0.0
        %742 = vmatprep.subr.mxu0 0.0
        %743 = vmatpush1.msra.mxu0 0.0
        %744 = vmatprep.subr.mxu0 0.0
        %745 = vmatpush1.msra.mxu0 0.0
        %746 = vmatprep.subr.mxu0 0.0
        %747 = vmatpush1.msra.mxu0 0.0
        %748 = vmatprep.subr.mxu0 0.0
        %749 = vmatpush1.msra.mxu0 0.0
        %750 = vmatprep.subr.mxu0 0.0
        %751 = vmatpush1.msra.mxu0 0.0
        %752 = vmatprep.subr.mxu0 0.0
        %753 = vmatpush1.msra.mxu0 0.0
        %754 = vmatprep.subr.mxu0 0.0
        %755 = vmatpush1.msra.mxu0 0.0
        %756 = vmatprep.subr.mxu0 0.0
        %757 = vmatpush1.msra.mxu0 0.0
        %758 = vmatprep.subr.mxu0 0.0
        %759 = vmatpush1.msra.mxu0 0.0
        %760 = vmatprep.subr.mxu0 0.0
        %761 = vmatpush1.msra.mxu0 0.0
        %762 = vmatprep.subr.mxu0 0.0
        %763 = vmatpush1.msra.mxu0 0.0
        %764 = vmatprep.subr.mxu0 0.0
        %765 = vmatpush1.msra.mxu0 0.0
        %766 = vmatprep.subr.mxu0 0.0
        %767 = vmatpush1.msra.mxu0 0.0
        %768 = vmatprep.subr.mxu0 0.0
        %769 = vmatpush1.msra.mxu0 0.0
        %770 = vmatprep.mubr.f32.mxu0 0.0
        %771 = vmatmul.mubr.f32.gmra.mrb[0].mxu0 %v701
        %v772 = vpop.f32.mrb[0].mxu0
        %v773 = vadd.f32 0.0, %v772
        %v774 = vpop.f32.mrb[0].mxu0
        %775 = vdwg.mxu0
        %v776 = vadd.f32 %v572, %v773
        %s777 = sadd.s32 %s183, 1
        %s778 = scalar_lea.vmem %s182, %s777
        %v779 = vld [vmem:[%s778] sm:$0xff]
        %v780 = vld [vmem:[%s778 + $0x18] sm:$0xff]
        %v781 = vld [vmem:[%s778 + $0x30] sm:$0xff]
        %v782 = vld [vmem:[%s778 + $0x48] sm:$0xff]
        %v783 = vcombine.low %v779, %v781
        %v784 = vcombine.high %v779, %v781
        %v786 = vunpack.c.l.s4 1983009808
        %v787 = vunpack.c.0.s8 %v786
        %v788 = vlaneseq
        %v789 = vshrl.u32 %v788, 7
        %v790 = vsub.s32 %v787, %v789
        %v791 = vrot.slane %v783, %v790
        %v793 = vunpack.c.l.s4 1983009808
        %v794 = vunpack.c.0.s8 %v793
        %v795 = vlaneseq
        %v796 = vshrl.u32 %v795, 7
        %v797 = vsub.s32 %v794, %v796
        %v798 = vrot.slane %v784, %v797
        %v799 = vcombine.low %v780, %v782
        %v800 = vcombine.high %v780, %v782
        %v802 = vunpack.c.l.s4 1983009808
        %v803 = vunpack.c.0.s8 %v802
        %v804 = vlaneseq
        %v805 = vshrl.u32 %v804, 7
        %v806 = vsub.s32 %v803, %v805
        %v807 = vrot.slane %v799, %v806
        %v809 = vunpack.c.l.s4 1983009808
        %v810 = vunpack.c.0.s8 %v809
        %v811 = vlaneseq
        %v812 = vshrl.u32 %v811, 7
        %v813 = vsub.s32 %v810, %v812
        %v814 = vrot.slane %v800, %v813
        %v815 = vcombine.low %v791, %v807
        %v816 = vcombine.high %v791, %v807
        %v818 = vunpack.c.l.s4 1934713408
        %v819 = vunpack.c.0.s8 %v818
        %v820 = vlaneseq
        %v821 = vshrl.u32 %v820, 7
        %v822 = vsub.s32 %v819, %v821
        %v823 = vrot.slane %v815, %v822
        %v825 = vunpack.c.l.s4 1934713408
        %v826 = vunpack.c.0.s8 %v825
        %v827 = vlaneseq
        %v828 = vshrl.u32 %v827, 7
        %v829 = vsub.s32 %v826, %v828
        %v830 = vrot.slane %v816, %v829
        %v831 = vcombine.low %v798, %v814
        %v832 = vcombine.high %v798, %v814
        %v834 = vunpack.c.l.s4 1934713408
        %v835 = vunpack.c.0.s8 %v834
        %v836 = vlaneseq
        %v837 = vshrl.u32 %v836, 7
        %v838 = vsub.s32 %v835, %v837
        %v839 = vrot.slane %v831, %v838
        %v841 = vunpack.c.l.s4 1934713408
        %v842 = vunpack.c.0.s8 %v841
        %v843 = vlaneseq
        %v844 = vshrl.u32 %v843, 7
        %v845 = vsub.s32 %v842, %v844
        %v846 = vrot.slane %v832, %v845
        %v847 = vcombine.high %v823, 0.0
        %v848 = vcombine.high %v830, 0.0
        %v849 = vcombine.high %v839, 0.0
        %v850 = vcombine.high %v846, 0.0
        %852 = vrot.lane.b32.xlu0 %v847, 16
        %v853 = vpop.permute.xlu0 %852
        %856 = vrot.lane.b32.xlu0 %v830, 32
        %v857 = vpop.permute.xlu0 %856
        %860 = vrot.lane.b32.xlu0 %v848, 48
        %v861 = vpop.permute.xlu0 %860
        %864 = vrot.lane.b32.xlu0 %v839, 64
        %v865 = vpop.permute.xlu0 %864
        %868 = vrot.lane.b32.xlu0 %v849, 80
        %v869 = vpop.permute.xlu0 %868
        %872 = vrot.lane.b32.xlu0 %v846, 96
        %v873 = vpop.permute.xlu0 %872
        %876 = vrot.lane.b32.xlu0 %v850, 112
        %v877 = vpop.permute.xlu0 %876
        %v879 = vsel %vm285, %v823, %v853
        %v880 = vsel %vm287, %v879, %v857
        %v881 = vsel %vm289, %v880, %v861
        %v882 = vsel %vm291, %v881, %v865
        %v883 = vsel %vm293, %v882, %v869
        %v884 = vsel %vm295, %v883, %v873
        %v885 = vsel %vm297, %v884, %v877
        %s886 = scalar_lea.vmem %s1, 24
        %v887 = vld [vmem:[%s886] sm:$0xff]
        %v889 = vsel %vm421, %v887, 0
        %v892 = vsel %vm425, %v885, 0
        %894 = vmatprep.subr.mxu0 0.0
        %895 = vmatpush1.msra.mxu0 %v892
        %896 = vmatprep.subr.mxu0 0.0
        %897 = vmatpush1.msra.mxu0 0.0
        %898 = vmatprep.subr.mxu0 0.0
        %899 = vmatpush1.msra.mxu0 0.0
        %900 = vmatprep.subr.mxu0 0.0
        %901 = vmatpush1.msra.mxu0 0.0
        %902 = vmatprep.subr.mxu0 0.0
        %903 = vmatpush1.msra.mxu0 0.0
        %904 = vmatprep.subr.mxu0 0.0
        %905 = vmatpush1.msra.mxu0 0.0
        %906 = vmatprep.subr.mxu0 0.0
        %907 = vmatpush1.msra.mxu0 0.0
        %908 = vmatprep.subr.mxu0 0.0
        %909 = vmatpush1.msra.mxu0 0.0
        %910 = vmatprep.subr.mxu0 0.0
        %911 = vmatpush1.msra.mxu0 0.0
        %912 = vmatprep.subr.mxu0 0.0
        %913 = vmatpush1.msra.mxu0 0.0
        %914 = vmatprep.subr.mxu0 0.0
        %915 = vmatpush1.msra.mxu0 0.0
        %916 = vmatprep.subr.mxu0 0.0
        %917 = vmatpush1.msra.mxu0 0.0
        %918 = vmatprep.subr.mxu0 0.0
        %919 = vmatpush1.msra.mxu0 0.0
        %920 = vmatprep.subr.mxu0 0.0
        %921 = vmatpush1.msra.mxu0 0.0
        %922 = vmatprep.subr.mxu0 0.0
        %923 = vmatpush1.msra.mxu0 0.0
        %924 = vmatprep.subr.mxu0 0.0
        %925 = vmatpush1.msra.mxu0 0.0
        %926 = vmatprep.subr.mxu0 0.0
        %927 = vmatpush1.msra.mxu0 0.0
        %928 = vmatprep.subr.mxu0 0.0
        %929 = vmatpush1.msra.mxu0 0.0
        %930 = vmatprep.subr.mxu0 0.0
        %931 = vmatpush1.msra.mxu0 0.0
        %932 = vmatprep.subr.mxu0 0.0
        %933 = vmatpush1.msra.mxu0 0.0
        %934 = vmatprep.subr.mxu0 0.0
        %935 = vmatpush1.msra.mxu0 0.0
        %936 = vmatprep.subr.mxu0 0.0
        %937 = vmatpush1.msra.mxu0 0.0
        %938 = vmatprep.subr.mxu0 0.0
        %939 = vmatpush1.msra.mxu0 0.0
        %940 = vmatprep.subr.mxu0 0.0
        %941 = vmatpush1.msra.mxu0 0.0
        %942 = vmatprep.subr.mxu0 0.0
        %943 = vmatpush1.msra.mxu0 0.0
        %944 = vmatprep.subr.mxu0 0.0
        %945 = vmatpush1.msra.mxu0 0.0
        %946 = vmatprep.subr.mxu0 0.0
        %947 = vmatpush1.msra.mxu0 0.0
        %948 = vmatprep.subr.mxu0 0.0
        %949 = vmatpush1.msra.mxu0 0.0
        %950 = vmatprep.subr.mxu0 0.0
        %951 = vmatpush1.msra.mxu0 0.0
        %952 = vmatprep.subr.mxu0 0.0
        %953 = vmatpush1.msra.mxu0 0.0
        %954 = vmatprep.subr.mxu0 0.0
        %955 = vmatpush1.msra.mxu0 0.0
        %956 = vmatprep.subr.mxu0 0.0
        %957 = vmatpush1.msra.mxu0 0.0
        %958 = vmatprep.mubr.f32.mxu0 0.0
        %959 = vmatmul.mubr.f32.gmra.mrb[0].mxu0 %v889
        %v960 = vpop.f32.mrb[0].mxu0
        %v961 = vadd.f32 0.0, %v960
        %v962 = vpop.f32.mrb[0].mxu0
        %963 = vdwg.mxu0
        %v964 = vadd.f32 %v776, %v961
        %v965 = vld [vmem:[%s778] sm:$0xff]
        %v966 = vld [vmem:[%s778 + $0x18] sm:$0xff]
        %v967 = vld [vmem:[%s778 + $0x30] sm:$0xff]
        %v968 = vld [vmem:[%s778 + $0x48] sm:$0xff]
        %973 = vrot.lane.b32.xlu0 %v965, 127
        %v974 = vpop.permute.xlu0 %973
        %975 = vrot.lane.b32.xlu0 %v966, 127
        %v976 = vpop.permute.xlu0 %975
        %977 = vrot.lane.b32.xlu0 %v967, 127
        %v978 = vpop.permute.xlu0 %977
        %979 = vrot.lane.b32.xlu0 %v968, 127
        %v980 = vpop.permute.xlu0 %979
        %v985 = vcombine.low %v974, %v978
        %v986 = vcombine.high %v974, %v978
        %v988 = vunpack.c.l.s4 1983009808
        %v989 = vunpack.c.0.s8 %v988
        %v990 = vlaneseq
        %v991 = vshrl.u32 %v990, 7
        %v992 = vsub.s32 %v989, %v991
        %v993 = vrot.slane %v985, %v992
        %v995 = vunpack.c.l.s4 1983009808
        %v996 = vunpack.c.0.s8 %v995
        %v997 = vlaneseq
        %v998 = vshrl.u32 %v997, 7
        %v999 = vsub.s32 %v996, %v998
        %v1000 = vrot.slane %v986, %v999
        %v1001 = vcombine.low %v976, %v980
        %v1002 = vcombine.high %v976, %v980
        %v1004 = vunpack.c.l.s4 1983009808
        %v1005 = vunpack.c.0.s8 %v1004
        %v1006 = vlaneseq
        %v1007 = vshrl.u32 %v1006, 7
        %v1008 = vsub.s32 %v1005, %v1007
        %v1009 = vrot.slane %v1001, %v1008
        %v1011 = vunpack.c.l.s4 1983009808
        %v1012 = vunpack.c.0.s8 %v1011
        %v1013 = vlaneseq
        %v1014 = vshrl.u32 %v1013, 7
        %v1015 = vsub.s32 %v1012, %v1014
        %v1016 = vrot.slane %v1002, %v1015
        %v1017 = vcombine.low %v993, %v1009
        %v1018 = vcombine.high %v993, %v1009
        %v1020 = vunpack.c.l.s4 1934713408
        %v1021 = vunpack.c.0.s8 %v1020
        %v1022 = vlaneseq
        %v1023 = vshrl.u32 %v1022, 7
        %v1024 = vsub.s32 %v1021, %v1023
        %v1025 = vrot.slane %v1017, %v1024
        %v1027 = vunpack.c.l.s4 1934713408
        %v1028 = vunpack.c.0.s8 %v1027
        %v1029 = vlaneseq
        %v1030 = vshrl.u32 %v1029, 7
        %v1031 = vsub.s32 %v1028, %v1030
        %v1032 = vrot.slane %v1018, %v1031
        %v1033 = vcombine.low %v1000, %v1016
        %v1034 = vcombine.high %v1000, %v1016
        %v1036 = vunpack.c.l.s4 1934713408
        %v1037 = vunpack.c.0.s8 %v1036
        %v1038 = vlaneseq
        %v1039 = vshrl.u32 %v1038, 7
        %v1040 = vsub.s32 %v1037, %v1039
        %v1041 = vrot.slane %v1033, %v1040
        %v1043 = vunpack.c.l.s4 1934713408
        %v1044 = vunpack.c.0.s8 %v1043
        %v1045 = vlaneseq
        %v1046 = vshrl.u32 %v1045, 7
        %v1047 = vsub.s32 %v1044, %v1046
        %v1048 = vrot.slane %v1034, %v1047
        %v1049 = vcombine.high %v1025, 0.0
        %v1050 = vcombine.high %v1032, 0.0
        %v1051 = vcombine.high %v1041, 0.0
        %v1052 = vcombine.high %v1048, 0.0
        %1054 = vrot.lane.b32.xlu0 %v1049, 16
        %v1055 = vpop.permute.xlu0 %1054
        %1058 = vrot.lane.b32.xlu0 %v1032, 32
        %v1059 = vpop.permute.xlu0 %1058
        %1062 = vrot.lane.b32.xlu0 %v1050, 48
        %v1063 = vpop.permute.xlu0 %1062
        %1066 = vrot.lane.b32.xlu0 %v1041, 64
        %v1067 = vpop.permute.xlu0 %1066
        %1070 = vrot.lane.b32.xlu0 %v1051, 80
        %v1071 = vpop.permute.xlu0 %1070
        %1074 = vrot.lane.b32.xlu0 %v1048, 96
        %v1075 = vpop.permute.xlu0 %1074
        %1078 = vrot.lane.b32.xlu0 %v1052, 112
        %v1079 = vpop.permute.xlu0 %1078
        %v1081 = vsel %vm285, %v1025, %v1055
        %v1082 = vsel %vm287, %v1081, %v1059
        %v1083 = vsel %vm289, %v1082, %v1063
        %v1084 = vsel %vm291, %v1083, %v1067
        %v1085 = vsel %vm293, %v1084, %v1071
        %v1086 = vsel %vm295, %v1085, %v1075
        %v1087 = vsel %vm297, %v1086, %v1079
        %s1088 = scalar_lea.vmem %s1, 32
        %v1089 = vld [vmem:[%s1088] sm:$0xff]
        %v1091 = vsel %vm421, %v1089, 0
        %v1094 = vsel %vm425, %v1087, 0
        %1096 = vmatprep.subr.mxu0 0.0
        %1097 = vmatpush1.msra.mxu0 %v1094
        %1098 = vmatprep.subr.mxu0 0.0
        %1099 = vmatpush1.msra.mxu0 0.0
        %1100 = vmatprep.subr.mxu0 0.0
        %1101 = vmatpush1.msra.mxu0 0.0
        %1102 = vmatprep.subr.mxu0 0.0
        %1103 = vmatpush1.msra.mxu0 0.0
        %1104 = vmatprep.subr.mxu0 0.0
        %1105 = vmatpush1.msra.mxu0 0.0
        %1106 = vmatprep.subr.mxu0 0.0
        %1107 = vmatpush1.msra.mxu0 0.0
        %1108 = vmatprep.subr.mxu0 0.0
        %1109 = vmatpush1.msra.mxu0 0.0
        %1110 = vmatprep.subr.mxu0 0.0
        %1111 = vmatpush1.msra.mxu0 0.0
        %1112 = vmatprep.subr.mxu0 0.0
        %1113 = vmatpush1.msra.mxu0 0.0
        %1114 = vmatprep.subr.mxu0 0.0
        %1115 = vmatpush1.msra.mxu0 0.0
        %1116 = vmatprep.subr.mxu0 0.0
        %1117 = vmatpush1.msra.mxu0 0.0
        %1118 = vmatprep.subr.mxu0 0.0
        %1119 = vmatpush1.msra.mxu0 0.0
        %1120 = vmatprep.subr.mxu0 0.0
        %1121 = vmatpush1.msra.mxu0 0.0
        %1122 = vmatprep.subr.mxu0 0.0
        %1123 = vmatpush1.msra.mxu0 0.0
        %1124 = vmatprep.subr.mxu0 0.0
        %1125 = vmatpush1.msra.mxu0 0.0
        %1126 = vmatprep.subr.mxu0 0.0
        %1127 = vmatpush1.msra.mxu0 0.0
        %1128 = vmatprep.subr.mxu0 0.0
        %1129 = vmatpush1.msra.mxu0 0.0
        %1130 = vmatprep.subr.mxu0 0.0
        %1131 = vmatpush1.msra.mxu0 0.0
        %1132 = vmatprep.subr.mxu0 0.0
        %1133 = vmatpush1.msra.mxu0 0.0
        %1134 = vmatprep.subr.mxu0 0.0
        %1135 = vmatpush1.msra.mxu0 0.0
        %1136 = vmatprep.subr.mxu0 0.0
        %1137 = vmatpush1.msra.mxu0 0.0
        %1138 = vmatprep.subr.mxu0 0.0
        %1139 = vmatpush1.msra.mxu0 0.0
        %1140 = vmatprep.subr.mxu0 0.0
        %1141 = vmatpush1.msra.mxu0 0.0
        %1142 = vmatprep.subr.mxu0 0.0
        %1143 = vmatpush1.msra.mxu0 0.0
        %1144 = vmatprep.subr.mxu0 0.0
        %1145 = vmatpush1.msra.mxu0 0.0
        %1146 = vmatprep.subr.mxu0 0.0
        %1147 = vmatpush1.msra.mxu0 0.0
        %1148 = vmatprep.subr.mxu0 0.0
        %1149 = vmatpush1.msra.mxu0 0.0
        %1150 = vmatprep.subr.mxu0 0.0
        %1151 = vmatpush1.msra.mxu0 0.0
        %1152 = vmatprep.subr.mxu0 0.0
        %1153 = vmatpush1.msra.mxu0 0.0
        %1154 = vmatprep.subr.mxu0 0.0
        %1155 = vmatpush1.msra.mxu0 0.0
        %1156 = vmatprep.subr.mxu0 0.0
        %1157 = vmatpush1.msra.mxu0 0.0
        %1158 = vmatprep.subr.mxu0 0.0
        %1159 = vmatpush1.msra.mxu0 0.0
        %1160 = vmatprep.mubr.f32.mxu0 0.0
        %1161 = vmatmul.mubr.f32.gmra.mrb[0].mxu0 %v1091
        %v1162 = vpop.f32.mrb[0].mxu0
        %v1163 = vadd.f32 0.0, %v1162
        %v1164 = vpop.f32.mrb[0].mxu0
        %1165 = vdwg.mxu0
        %v1166 = vadd.f32 %v964, %v1163
        %v1167 = vld [vmem:[%s778] sm:$0xff]
        %v1168 = vld [vmem:[%s778 + $0x18] sm:$0xff]
        %v1169 = vld [vmem:[%s778 + $0x30] sm:$0xff]
        %v1170 = vld [vmem:[%s778 + $0x48] sm:$0xff]
        %1175 = vrot.lane.b32.xlu0 %v1167, 126
        %v1176 = vpop.permute.xlu0 %1175
        %1177 = vrot.lane.b32.xlu0 %v1168, 126
        %v1178 = vpop.permute.xlu0 %1177
        %1179 = vrot.lane.b32.xlu0 %v1169, 126
        %v1180 = vpop.permute.xlu0 %1179
        %1181 = vrot.lane.b32.xlu0 %v1170, 126
        %v1182 = vpop.permute.xlu0 %1181
        %v1187 = vcombine.low %v1176, %v1180
        %v1188 = vcombine.high %v1176, %v1180
        %v1190 = vunpack.c.l.s4 1983009808
        %v1191 = vunpack.c.0.s8 %v1190
        %v1192 = vlaneseq
        %v1193 = vshrl.u32 %v1192, 7
        %v1194 = vsub.s32 %v1191, %v1193
        %v1195 = vrot.slane %v1187, %v1194
        %v1197 = vunpack.c.l.s4 1983009808
        %v1198 = vunpack.c.0.s8 %v1197
        %v1199 = vlaneseq
        %v1200 = vshrl.u32 %v1199, 7
        %v1201 = vsub.s32 %v1198, %v1200
        %v1202 = vrot.slane %v1188, %v1201
        %v1203 = vcombine.low %v1178, %v1182
        %v1204 = vcombine.high %v1178, %v1182
        %v1206 = vunpack.c.l.s4 1983009808
        %v1207 = vunpack.c.0.s8 %v1206
        %v1208 = vlaneseq
        %v1209 = vshrl.u32 %v1208, 7
        %v1210 = vsub.s32 %v1207, %v1209
        %v1211 = vrot.slane %v1203, %v1210
        %v1213 = vunpack.c.l.s4 1983009808
        %v1214 = vunpack.c.0.s8 %v1213
        %v1215 = vlaneseq
        %v1216 = vshrl.u32 %v1215, 7
        %v1217 = vsub.s32 %v1214, %v1216
        %v1218 = vrot.slane %v1204, %v1217
        %v1219 = vcombine.low %v1195, %v1211
        %v1220 = vcombine.high %v1195, %v1211
        %v1222 = vunpack.c.l.s4 1934713408
        %v1223 = vunpack.c.0.s8 %v1222
        %v1224 = vlaneseq
        %v1225 = vshrl.u32 %v1224, 7
        %v1226 = vsub.s32 %v1223, %v1225
        %v1227 = vrot.slane %v1219, %v1226
        %v1229 = vunpack.c.l.s4 1934713408
        %v1230 = vunpack.c.0.s8 %v1229
        %v1231 = vlaneseq
        %v1232 = vshrl.u32 %v1231, 7
        %v1233 = vsub.s32 %v1230, %v1232
        %v1234 = vrot.slane %v1220, %v1233
        %v1235 = vcombine.low %v1202, %v1218
        %v1236 = vcombine.high %v1202, %v1218
        %v1238 = vunpack.c.l.s4 1934713408
        %v1239 = vunpack.c.0.s8 %v1238
        %v1240 = vlaneseq
        %v1241 = vshrl.u32 %v1240, 7
        %v1242 = vsub.s32 %v1239, %v1241
        %v1243 = vrot.slane %v1235, %v1242
        %v1245 = vunpack.c.l.s4 1934713408
        %v1246 = vunpack.c.0.s8 %v1245
        %v1247 = vlaneseq
        %v1248 = vshrl.u32 %v1247, 7
        %v1249 = vsub.s32 %v1246, %v1248
        %v1250 = vrot.slane %v1236, %v1249
        %v1251 = vcombine.high %v1227, 0.0
        %v1252 = vcombine.high %v1234, 0.0
        %v1253 = vcombine.high %v1243, 0.0
        %v1254 = vcombine.high %v1250, 0.0
        %1256 = vrot.lane.b32.xlu0 %v1251, 16
        %v1257 = vpop.permute.xlu0 %1256
        %1260 = vrot.lane.b32.xlu0 %v1234, 32
        %v1261 = vpop.permute.xlu0 %1260
        %1264 = vrot.lane.b32.xlu0 %v1252, 48
        %v1265 = vpop.permute.xlu0 %1264
        %1268 = vrot.lane.b32.xlu0 %v1243, 64
        %v1269 = vpop.permute.xlu0 %1268
        %1272 = vrot.lane.b32.xlu0 %v1253, 80
        %v1273 = vpop.permute.xlu0 %1272
        %1276 = vrot.lane.b32.xlu0 %v1250, 96
        %v1277 = vpop.permute.xlu0 %1276
        %1280 = vrot.lane.b32.xlu0 %v1254, 112
        %v1281 = vpop.permute.xlu0 %1280
        %v1283 = vsel %vm285, %v1227, %v1257
        %v1284 = vsel %vm287, %v1283, %v1261
        %v1285 = vsel %vm289, %v1284, %v1265
        %v1286 = vsel %vm291, %v1285, %v1269
        %v1287 = vsel %vm293, %v1286, %v1273
        %v1288 = vsel %vm295, %v1287, %v1277
        %v1289 = vsel %vm297, %v1288, %v1281
        %s1290 = scalar_lea.vmem %s1, 40
        %v1291 = vld [vmem:[%s1290] sm:$0xff]
        %v1293 = vsel %vm421, %v1291, 0
        %v1296 = vsel %vm425, %v1289, 0
        %1298 = vmatprep.subr.mxu0 0.0
        %1299 = vmatpush1.msra.mxu0 %v1296
        %1300 = vmatprep.subr.mxu0 0.0
        %1301 = vmatpush1.msra.mxu0 0.0
        %1302 = vmatprep.subr.mxu0 0.0
        %1303 = vmatpush1.msra.mxu0 0.0
        %1304 = vmatprep.subr.mxu0 0.0
        %1305 = vmatpush1.msra.mxu0 0.0
        %1306 = vmatprep.subr.mxu0 0.0
        %1307 = vmatpush1.msra.mxu0 0.0
        %1308 = vmatprep.subr.mxu0 0.0
        %1309 = vmatpush1.msra.mxu0 0.0
        %1310 = vmatprep.subr.mxu0 0.0
        %1311 = vmatpush1.msra.mxu0 0.0
        %1312 = vmatprep.subr.mxu0 0.0
        %1313 = vmatpush1.msra.mxu0 0.0
        %1314 = vmatprep.subr.mxu0 0.0
        %1315 = vmatpush1.msra.mxu0 0.0
        %1316 = vmatprep.subr.mxu0 0.0
        %1317 = vmatpush1.msra.mxu0 0.0
        %1318 = vmatprep.subr.mxu0 0.0
        %1319 = vmatpush1.msra.mxu0 0.0
        %1320 = vmatprep.subr.mxu0 0.0
        %1321 = vmatpush1.msra.mxu0 0.0
        %1322 = vmatprep.subr.mxu0 0.0
        %1323 = vmatpush1.msra.mxu0 0.0
        %1324 = vmatprep.subr.mxu0 0.0
        %1325 = vmatpush1.msra.mxu0 0.0
        %1326 = vmatprep.subr.mxu0 0.0
        %1327 = vmatpush1.msra.mxu0 0.0
        %1328 = vmatprep.subr.mxu0 0.0
        %1329 = vmatpush1.msra.mxu0 0.0
        %1330 = vmatprep.subr.mxu0 0.0
        %1331 = vmatpush1.msra.mxu0 0.0
        %1332 = vmatprep.subr.mxu0 0.0
        %1333 = vmatpush1.msra.mxu0 0.0
        %1334 = vmatprep.subr.mxu0 0.0
        %1335 = vmatpush1.msra.mxu0 0.0
        %1336 = vmatprep.subr.mxu0 0.0
        %1337 = vmatpush1.msra.mxu0 0.0
        %1338 = vmatprep.subr.mxu0 0.0
        %1339 = vmatpush1.msra.mxu0 0.0
        %1340 = vmatprep.subr.mxu0 0.0
        %1341 = vmatpush1.msra.mxu0 0.0
        %1342 = vmatprep.subr.mxu0 0.0
        %1343 = vmatpush1.msra.mxu0 0.0
        %1344 = vmatprep.subr.mxu0 0.0
        %1345 = vmatpush1.msra.mxu0 0.0
        %1346 = vmatprep.subr.mxu0 0.0
        %1347 = vmatpush1.msra.mxu0 0.0
        %1348 = vmatprep.subr.mxu0 0.0
        %1349 = vmatpush1.msra.mxu0 0.0
        %1350 = vmatprep.subr.mxu0 0.0
        %1351 = vmatpush1.msra.mxu0 0.0
        %1352 = vmatprep.subr.mxu0 0.0
        %1353 = vmatpush1.msra.mxu0 0.0
        %1354 = vmatprep.subr.mxu0 0.0
        %1355 = vmatpush1.msra.mxu0 0.0
        %1356 = vmatprep.subr.mxu0 0.0
        %1357 = vmatpush1.msra.mxu0 0.0
        %1358 = vmatprep.subr.mxu0 0.0
        %1359 = vmatpush1.msra.mxu0 0.0
        %1360 = vmatprep.subr.mxu0 0.0
        %1361 = vmatpush1.msra.mxu0 0.0
        %1362 = vmatprep.mubr.f32.mxu0 0.0
        %1363 = vmatmul.mubr.f32.gmra.mrb[0].mxu0 %v1293
        %v1364 = vpop.f32.mrb[0].mxu0
        %v1365 = vadd.f32 0.0, %v1364
        %v1366 = vpop.f32.mrb[0].mxu0
        %1367 = vdwg.mxu0
        %v1368 = vadd.f32 %v1166, %v1365
        %s1369 = sadd.s32 %s183, 2
        %s1370 = scalar_lea.vmem %s182, %s1369
        %v1371 = vld [vmem:[%s1370] sm:$0xff]
        %v1372 = vld [vmem:[%s1370 + $0x18] sm:$0xff]
        %v1373 = vld [vmem:[%s1370 + $0x30] sm:$0xff]
        %v1374 = vld [vmem:[%s1370 + $0x48] sm:$0xff]
        %v1375 = vcombine.low %v1371, %v1373
        %v1376 = vcombine.high %v1371, %v1373
        %v1378 = vunpack.c.l.s4 1983009808
        %v1379 = vunpack.c.0.s8 %v1378
        %v1380 = vlaneseq
        %v1381 = vshrl.u32 %v1380, 7
        %v1382 = vsub.s32 %v1379, %v1381
        %v1383 = vrot.slane %v1375, %v1382
        %v1385 = vunpack.c.l.s4 1983009808
        %v1386 = vunpack.c.0.s8 %v1385
        %v1387 = vlaneseq
        %v1388 = vshrl.u32 %v1387, 7
        %v1389 = vsub.s32 %v1386, %v1388
        %v1390 = vrot.slane %v1376, %v1389
        %v1391 = vcombine.low %v1372, %v1374
        %v1392 = vcombine.high %v1372, %v1374
        %v1394 = vunpack.c.l.s4 1983009808
        %v1395 = vunpack.c.0.s8 %v1394
        %v1396 = vlaneseq
        %v1397 = vshrl.u32 %v1396, 7
        %v1398 = vsub.s32 %v1395, %v1397
        %v1399 = vrot.slane %v1391, %v1398
        %v1401 = vunpack.c.l.s4 1983009808
        %v1402 = vunpack.c.0.s8 %v1401
        %v1403 = vlaneseq
        %v1404 = vshrl.u32 %v1403, 7
        %v1405 = vsub.s32 %v1402, %v1404
        %v1406 = vrot.slane %v1392, %v1405
        %v1407 = vcombine.low %v1383, %v1399
        %v1408 = vcombine.high %v1383, %v1399
        %v1410 = vunpack.c.l.s4 1934713408
        %v1411 = vunpack.c.0.s8 %v1410
        %v1412 = vlaneseq
        %v1413 = vshrl.u32 %v1412, 7
        %v1414 = vsub.s32 %v1411, %v1413
        %v1415 = vrot.slane %v1407, %v1414
        %v1417 = vunpack.c.l.s4 1934713408
        %v1418 = vunpack.c.0.s8 %v1417
        %v1419 = vlaneseq
        %v1420 = vshrl.u32 %v1419, 7
        %v1421 = vsub.s32 %v1418, %v1420
        %v1422 = vrot.slane %v1408, %v1421
        %v1423 = vcombine.low %v1390, %v1406
        %v1424 = vcombine.high %v1390, %v1406
        %v1426 = vunpack.c.l.s4 1934713408
        %v1427 = vunpack.c.0.s8 %v1426
        %v1428 = vlaneseq
        %v1429 = vshrl.u32 %v1428, 7
        %v1430 = vsub.s32 %v1427, %v1429
        %v1431 = vrot.slane %v1423, %v1430
        %v1433 = vunpack.c.l.s4 1934713408
        %v1434 = vunpack.c.0.s8 %v1433
        %v1435 = vlaneseq
        %v1436 = vshrl.u32 %v1435, 7
        %v1437 = vsub.s32 %v1434, %v1436
        %v1438 = vrot.slane %v1424, %v1437
        %v1439 = vcombine.high %v1415, 0.0
        %v1440 = vcombine.high %v1422, 0.0
        %v1441 = vcombine.high %v1431, 0.0
        %v1442 = vcombine.high %v1438, 0.0
        %1444 = vrot.lane.b32.xlu0 %v1439, 16
        %v1445 = vpop.permute.xlu0 %1444
        %1448 = vrot.lane.b32.xlu0 %v1422, 32
        %v1449 = vpop.permute.xlu0 %1448
        %1452 = vrot.lane.b32.xlu0 %v1440, 48
        %v1453 = vpop.permute.xlu0 %1452
        %1456 = vrot.lane.b32.xlu0 %v1431, 64
        %v1457 = vpop.permute.xlu0 %1456
        %1460 = vrot.lane.b32.xlu0 %v1441, 80
        %v1461 = vpop.permute.xlu0 %1460
        %1464 = vrot.lane.b32.xlu0 %v1438, 96
        %v1465 = vpop.permute.xlu0 %1464
        %1468 = vrot.lane.b32.xlu0 %v1442, 112
        %v1469 = vpop.permute.xlu0 %1468
        %v1471 = vsel %vm285, %v1415, %v1445
        %v1472 = vsel %vm287, %v1471, %v1449
        %v1473 = vsel %vm289, %v1472, %v1453
        %v1474 = vsel %vm291, %v1473, %v1457
        %v1475 = vsel %vm293, %v1474, %v1461
        %v1476 = vsel %vm295, %v1475, %v1465
        %v1477 = vsel %vm297, %v1476, %v1469
        %s1478 = scalar_lea.vmem %s1, 48
        %v1479 = vld [vmem:[%s1478] sm:$0xff]
        %v1481 = vsel %vm421, %v1479, 0
        %v1484 = vsel %vm425, %v1477, 0
        %1486 = vmatprep.subr.mxu0 0.0
        %1487 = vmatpush1.msra.mxu0 %v1484
        %1488 = vmatprep.subr.mxu0 0.0
        %1489 = vmatpush1.msra.mxu0 0.0
        %1490 = vmatprep.subr.mxu0 0.0
        %1491 = vmatpush1.msra.mxu0 0.0
        %1492 = vmatprep.subr.mxu0 0.0
        %1493 = vmatpush1.msra.mxu0 0.0
        %1494 = vmatprep.subr.mxu0 0.0
        %1495 = vmatpush1.msra.mxu0 0.0
        %1496 = vmatprep.subr.mxu0 0.0
        %1497 = vmatpush1.msra.mxu0 0.0
        %1498 = vmatprep.subr.mxu0 0.0
        %1499 = vmatpush1.msra.mxu0 0.0
        %1500 = vmatprep.subr.mxu0 0.0
        %1501 = vmatpush1.msra.mxu0 0.0
        %1502 = vmatprep.subr.mxu0 0.0
        %1503 = vmatpush1.msra.mxu0 0.0
        %1504 = vmatprep.subr.mxu0 0.0
        %1505 = vmatpush1.msra.mxu0 0.0
        %1506 = vmatprep.subr.mxu0 0.0
        %1507 = vmatpush1.msra.mxu0 0.0
        %1508 = vmatprep.subr.mxu0 0.0
        %1509 = vmatpush1.msra.mxu0 0.0
        %1510 = vmatprep.subr.mxu0 0.0
        %1511 = vmatpush1.msra.mxu0 0.0
        %1512 = vmatprep.subr.mxu0 0.0
        %1513 = vmatpush1.msra.mxu0 0.0
        %1514 = vmatprep.subr.mxu0 0.0
        %1515 = vmatpush1.msra.mxu0 0.0
        %1516 = vmatprep.subr.mxu0 0.0
        %1517 = vmatpush1.msra.mxu0 0.0
        %1518 = vmatprep.subr.mxu0 0.0
        %1519 = vmatpush1.msra.mxu0 0.0
        %1520 = vmatprep.subr.mxu0 0.0
        %1521 = vmatpush1.msra.mxu0 0.0
        %1522 = vmatprep.subr.mxu0 0.0
        %1523 = vmatpush1.msra.mxu0 0.0
        %1524 = vmatprep.subr.mxu0 0.0
        %1525 = vmatpush1.msra.mxu0 0.0
        %1526 = vmatprep.subr.mxu0 0.0
        %1527 = vmatpush1.msra.mxu0 0.0
        %1528 = vmatprep.subr.mxu0 0.0
        %1529 = vmatpush1.msra.mxu0 0.0
        %1530 = vmatprep.subr.mxu0 0.0
        %1531 = vmatpush1.msra.mxu0 0.0
        %1532 = vmatprep.subr.mxu0 0.0
        %1533 = vmatpush1.msra.mxu0 0.0
        %1534 = vmatprep.subr.mxu0 0.0
        %1535 = vmatpush1.msra.mxu0 0.0
        %1536 = vmatprep.subr.mxu0 0.0
        %1537 = vmatpush1.msra.mxu0 0.0
        %1538 = vmatprep.subr.mxu0 0.0
        %1539 = vmatpush1.msra.mxu0 0.0
        %1540 = vmatprep.subr.mxu0 0.0
        %1541 = vmatpush1.msra.mxu0 0.0
        %1542 = vmatprep.subr.mxu0 0.0
        %1543 = vmatpush1.msra.mxu0 0.0
        %1544 = vmatprep.subr.mxu0 0.0
        %1545 = vmatpush1.msra.mxu0 0.0
        %1546 = vmatprep.subr.mxu0 0.0
        %1547 = vmatpush1.msra.mxu0 0.0
        %1548 = vmatprep.subr.mxu0 0.0
        %1549 = vmatpush1.msra.mxu0 0.0
        %1550 = vmatprep.mubr.f32.mxu0 0.0
        %1551 = vmatmul.mubr.f32.gmra.mrb[0].mxu0 %v1481
        %v1552 = vpop.f32.mrb[0].mxu0
        %v1553 = vadd.f32 0.0, %v1552
        %v1554 = vpop.f32.mrb[0].mxu0
        %1555 = vdwg.mxu0
        %v1556 = vadd.f32 %v1368, %v1553
        %v1557 = vld [vmem:[%s1370] sm:$0xff]
        %v1558 = vld [vmem:[%s1370 + $0x18] sm:$0xff]
        %v1559 = vld [vmem:[%s1370 + $0x30] sm:$0xff]
        %v1560 = vld [vmem:[%s1370 + $0x48] sm:$0xff]
        %1565 = vrot.lane.b32.xlu0 %v1557, 127
        %v1566 = vpop.permute.xlu0 %1565
        %1567 = vrot.lane.b32.xlu0 %v1558, 127
        %v1568 = vpop.permute.xlu0 %1567
        %1569 = vrot.lane.b32.xlu0 %v1559, 127
        %v1570 = vpop.permute.xlu0 %1569
        %1571 = vrot.lane.b32.xlu0 %v1560, 127
        %v1572 = vpop.permute.xlu0 %1571
        %v1577 = vcombine.low %v1566, %v1570
        %v1578 = vcombine.high %v1566, %v1570
        %v1580 = vunpack.c.l.s4 1983009808
        %v1581 = vunpack.c.0.s8 %v1580
        %v1582 = vlaneseq
        %v1583 = vshrl.u32 %v1582, 7
        %v1584 = vsub.s32 %v1581, %v1583
        %v1585 = vrot.slane %v1577, %v1584
        %v1587 = vunpack.c.l.s4 1983009808
        %v1588 = vunpack.c.0.s8 %v1587
        %v1589 = vlaneseq
        %v1590 = vshrl.u32 %v1589, 7
        %v1591 = vsub.s32 %v1588, %v1590
        %v1592 = vrot.slane %v1578, %v1591
        %v1593 = vcombine.low %v1568, %v1572
        %v1594 = vcombine.high %v1568, %v1572
        %v1596 = vunpack.c.l.s4 1983009808
        %v1597 = vunpack.c.0.s8 %v1596
        %v1598 = vlaneseq
        %v1599 = vshrl.u32 %v1598, 7
        %v1600 = vsub.s32 %v1597, %v1599
        %v1601 = vrot.slane %v1593, %v1600
        %v1603 = vunpack.c.l.s4 1983009808
        %v1604 = vunpack.c.0.s8 %v1603
        %v1605 = vlaneseq
        %v1606 = vshrl.u32 %v1605, 7
        %v1607 = vsub.s32 %v1604, %v1606
        %v1608 = vrot.slane %v1594, %v1607
        %v1609 = vcombine.low %v1585, %v1601
        %v1610 = vcombine.high %v1585, %v1601
        %v1612 = vunpack.c.l.s4 1934713408
        %v1613 = vunpack.c.0.s8 %v1612
        %v1614 = vlaneseq
        %v1615 = vshrl.u32 %v1614, 7
        %v1616 = vsub.s32 %v1613, %v1615
        %v1617 = vrot.slane %v1609, %v1616
        %v1619 = vunpack.c.l.s4 1934713408
        %v1620 = vunpack.c.0.s8 %v1619
        %v1621 = vlaneseq
        %v1622 = vshrl.u32 %v1621, 7
        %v1623 = vsub.s32 %v1620, %v1622
        %v1624 = vrot.slane %v1610, %v1623
        %v1625 = vcombine.low %v1592, %v1608
        %v1626 = vcombine.high %v1592, %v1608
        %v1628 = vunpack.c.l.s4 1934713408
        %v1629 = vunpack.c.0.s8 %v1628
        %v1630 = vlaneseq
        %v1631 = vshrl.u32 %v1630, 7
        %v1632 = vsub.s32 %v1629, %v1631
        %v1633 = vrot.slane %v1625, %v1632
        %v1635 = vunpack.c.l.s4 1934713408
        %v1636 = vunpack.c.0.s8 %v1635
        %v1637 = vlaneseq
        %v1638 = vshrl.u32 %v1637, 7
        %v1639 = vsub.s32 %v1636, %v1638
        %v1640 = vrot.slane %v1626, %v1639
        %v1641 = vcombine.high %v1617, 0.0
        %v1642 = vcombine.high %v1624, 0.0
        %v1643 = vcombine.high %v1633, 0.0
        %v1644 = vcombine.high %v1640, 0.0
        %1646 = vrot.lane.b32.xlu0 %v1641, 16
        %v1647 = vpop.permute.xlu0 %1646
        %1650 = vrot.lane.b32.xlu0 %v1624, 32
        %v1651 = vpop.permute.xlu0 %1650
        %1654 = vrot.lane.b32.xlu0 %v1642, 48
        %v1655 = vpop.permute.xlu0 %1654
        %1658 = vrot.lane.b32.xlu0 %v1633, 64
        %v1659 = vpop.permute.xlu0 %1658
        %1662 = vrot.lane.b32.xlu0 %v1643, 80
        %v1663 = vpop.permute.xlu0 %1662
        %1666 = vrot.lane.b32.xlu0 %v1640, 96
        %v1667 = vpop.permute.xlu0 %1666
        %1670 = vrot.lane.b32.xlu0 %v1644, 112
        %v1671 = vpop.permute.xlu0 %1670
        %v1673 = vsel %vm285, %v1617, %v1647
        %v1674 = vsel %vm287, %v1673, %v1651
        %v1675 = vsel %vm289, %v1674, %v1655
        %v1676 = vsel %vm291, %v1675, %v1659
        %v1677 = vsel %vm293, %v1676, %v1663
        %v1678 = vsel %vm295, %v1677, %v1667
        %v1679 = vsel %vm297, %v1678, %v1671
        %s1680 = scalar_lea.vmem %s1, 56
        %v1681 = vld [vmem:[%s1680] sm:$0xff]
        %v1683 = vsel %vm421, %v1681, 0
        %v1686 = vsel %vm425, %v1679, 0
        %1688 = vmatprep.subr.mxu0 0.0
        %1689 = vmatpush1.msra.mxu0 %v1686
        %1690 = vmatprep.subr.mxu0 0.0
        %1691 = vmatpush1.msra.mxu0 0.0
        %1692 = vmatprep.subr.mxu0 0.0
        %1693 = vmatpush1.msra.mxu0 0.0
        %1694 = vmatprep.subr.mxu0 0.0
        %1695 = vmatpush1.msra.mxu0 0.0
        %1696 = vmatprep.subr.mxu0 0.0
        %1697 = vmatpush1.msra.mxu0 0.0
        %1698 = vmatprep.subr.mxu0 0.0
        %1699 = vmatpush1.msra.mxu0 0.0
        %1700 = vmatprep.subr.mxu0 0.0
        %1701 = vmatpush1.msra.mxu0 0.0
        %1702 = vmatprep.subr.mxu0 0.0
        %1703 = vmatpush1.msra.mxu0 0.0
        %1704 = vmatprep.subr.mxu0 0.0
        %1705 = vmatpush1.msra.mxu0 0.0
        %1706 = vmatprep.subr.mxu0 0.0
        %1707 = vmatpush1.msra.mxu0 0.0
        %1708 = vmatprep.subr.mxu0 0.0
        %1709 = vmatpush1.msra.mxu0 0.0
        %1710 = vmatprep.subr.mxu0 0.0
        %1711 = vmatpush1.msra.mxu0 0.0
        %1712 = vmatprep.subr.mxu0 0.0
        %1713 = vmatpush1.msra.mxu0 0.0
        %1714 = vmatprep.subr.mxu0 0.0
        %1715 = vmatpush1.msra.mxu0 0.0
        %1716 = vmatprep.subr.mxu0 0.0
        %1717 = vmatpush1.msra.mxu0 0.0
        %1718 = vmatprep.subr.mxu0 0.0
        %1719 = vmatpush1.msra.mxu0 0.0
        %1720 = vmatprep.subr.mxu0 0.0
        %1721 = vmatpush1.msra.mxu0 0.0
        %1722 = vmatprep.subr.mxu0 0.0
        %1723 = vmatpush1.msra.mxu0 0.0
        %1724 = vmatprep.subr.mxu0 0.0
        %1725 = vmatpush1.msra.mxu0 0.0
        %1726 = vmatprep.subr.mxu0 0.0
        %1727 = vmatpush1.msra.mxu0 0.0
        %1728 = vmatprep.subr.mxu0 0.0
        %1729 = vmatpush1.msra.mxu0 0.0
        %1730 = vmatprep.subr.mxu0 0.0
        %1731 = vmatpush1.msra.mxu0 0.0
        %1732 = vmatprep.subr.mxu0 0.0
        %1733 = vmatpush1.msra.mxu0 0.0
        %1734 = vmatprep.subr.mxu0 0.0
        %1735 = vmatpush1.msra.mxu0 0.0
        %1736 = vmatprep.subr.mxu0 0.0
        %1737 = vmatpush1.msra.mxu0 0.0
        %1738 = vmatprep.subr.mxu0 0.0
        %1739 = vmatpush1.msra.mxu0 0.0
        %1740 = vmatprep.subr.mxu0 0.0
        %1741 = vmatpush1.msra.mxu0 0.0
        %1742 = vmatprep.subr.mxu0 0.0
        %1743 = vmatpush1.msra.mxu0 0.0
        %1744 = vmatprep.subr.mxu0 0.0
        %1745 = vmatpush1.msra.mxu0 0.0
        %1746 = vmatprep.subr.mxu0 0.0
        %1747 = vmatpush1.msra.mxu0 0.0
        %1748 = vmatprep.subr.mxu0 0.0
        %1749 = vmatpush1.msra.mxu0 0.0
        %1750 = vmatprep.subr.mxu0 0.0
        %1751 = vmatpush1.msra.mxu0 0.0
        %1752 = vmatprep.mubr.f32.mxu0 0.0
        %1753 = vmatmul.mubr.f32.gmra.mrb[0].mxu0 %v1683
        %v1754 = vpop.f32.mrb[0].mxu0
        %v1755 = vadd.f32 0.0, %v1754
        %v1756 = vpop.f32.mrb[0].mxu0
        %1757 = vdwg.mxu0
        %v1758 = vadd.f32 %v1556, %v1755
        %v1759 = vld [vmem:[%s1370] sm:$0xff]
        %v1760 = vld [vmem:[%s1370 + $0x18] sm:$0xff]
        %v1761 = vld [vmem:[%s1370 + $0x30] sm:$0xff]
        %v1762 = vld [vmem:[%s1370 + $0x48] sm:$0xff]
        %1767 = vrot.lane.b32.xlu0 %v1759, 126
        %v1768 = vpop.permute.xlu0 %1767
        %1769 = vrot.lane.b32.xlu0 %v1760, 126
        %v1770 = vpop.permute.xlu0 %1769
        %1771 = vrot.lane.b32.xlu0 %v1761, 126
        %v1772 = vpop.permute.xlu0 %1771
        %1773 = vrot.lane.b32.xlu0 %v1762, 126
        %v1774 = vpop.permute.xlu0 %1773
        %v1779 = vcombine.low %v1768, %v1772
        %v1780 = vcombine.high %v1768, %v1772
        %v1782 = vunpack.c.l.s4 1983009808
        %v1783 = vunpack.c.0.s8 %v1782
        %v1784 = vlaneseq
        %v1785 = vshrl.u32 %v1784, 7
        %v1786 = vsub.s32 %v1783, %v1785
        %v1787 = vrot.slane %v1779, %v1786
        %v1789 = vunpack.c.l.s4 1983009808
        %v1790 = vunpack.c.0.s8 %v1789
        %v1791 = vlaneseq
        %v1792 = vshrl.u32 %v1791, 7
        %v1793 = vsub.s32 %v1790, %v1792
        %v1794 = vrot.slane %v1780, %v1793
        %v1795 = vcombine.low %v1770, %v1774
        %v1796 = vcombine.high %v1770, %v1774
        %v1798 = vunpack.c.l.s4 1983009808
        %v1799 = vunpack.c.0.s8 %v1798
        %v1800 = vlaneseq
        %v1801 = vshrl.u32 %v1800, 7
        %v1802 = vsub.s32 %v1799, %v1801
        %v1803 = vrot.slane %v1795, %v1802
        %v1805 = vunpack.c.l.s4 1983009808
        %v1806 = vunpack.c.0.s8 %v1805
        %v1807 = vlaneseq
        %v1808 = vshrl.u32 %v1807, 7
        %v1809 = vsub.s32 %v1806, %v1808
        %v1810 = vrot.slane %v1796, %v1809
        %v1811 = vcombine.low %v1787, %v1803
        %v1812 = vcombine.high %v1787, %v1803
        %v1814 = vunpack.c.l.s4 1934713408
        %v1815 = vunpack.c.0.s8 %v1814
        %v1816 = vlaneseq
        %v1817 = vshrl.u32 %v1816, 7
        %v1818 = vsub.s32 %v1815, %v1817
        %v1819 = vrot.slane %v1811, %v1818
        %v1821 = vunpack.c.l.s4 1934713408
        %v1822 = vunpack.c.0.s8 %v1821
        %v1823 = vlaneseq
        %v1824 = vshrl.u32 %v1823, 7
        %v1825 = vsub.s32 %v1822, %v1824
        %v1826 = vrot.slane %v1812, %v1825
        %v1827 = vcombine.low %v1794, %v1810
        %v1828 = vcombine.high %v1794, %v1810
        %v1830 = vunpack.c.l.s4 1934713408
        %v1831 = vunpack.c.0.s8 %v1830
        %v1832 = vlaneseq
        %v1833 = vshrl.u32 %v1832, 7
        %v1834 = vsub.s32 %v1831, %v1833
        %v1835 = vrot.slane %v1827, %v1834
        %v1837 = vunpack.c.l.s4 1934713408
        %v1838 = vunpack.c.0.s8 %v1837
        %v1839 = vlaneseq
        %v1840 = vshrl.u32 %v1839, 7
        %v1841 = vsub.s32 %v1838, %v1840
        %v1842 = vrot.slane %v1828, %v1841
        %v1843 = vcombine.high %v1819, 0.0
        %v1844 = vcombine.high %v1826, 0.0
        %v1845 = vcombine.high %v1835, 0.0
        %v1846 = vcombine.high %v1842, 0.0
        %1848 = vrot.lane.b32.xlu0 %v1843, 16
        %v1849 = vpop.permute.xlu0 %1848
        %1852 = vrot.lane.b32.xlu0 %v1826, 32
        %v1853 = vpop.permute.xlu0 %1852
        %1856 = vrot.lane.b32.xlu0 %v1844, 48
        %v1857 = vpop.permute.xlu0 %1856
        %1860 = vrot.lane.b32.xlu0 %v1835, 64
        %v1861 = vpop.permute.xlu0 %1860
        %1864 = vrot.lane.b32.xlu0 %v1845, 80
        %v1865 = vpop.permute.xlu0 %1864
        %1868 = vrot.lane.b32.xlu0 %v1842, 96
        %v1869 = vpop.permute.xlu0 %1868
        %1872 = vrot.lane.b32.xlu0 %v1846, 112
        %v1873 = vpop.permute.xlu0 %1872
        %v1875 = vsel %vm285, %v1819, %v1849
        %v1876 = vsel %vm287, %v1875, %v1853
        %v1877 = vsel %vm289, %v1876, %v1857
        %v1878 = vsel %vm291, %v1877, %v1861
        %v1879 = vsel %vm293, %v1878, %v1865
        %v1880 = vsel %vm295, %v1879, %v1869
        %v1881 = vsel %vm297, %v1880, %v1873
        %s1882 = scalar_lea.vmem %s1, 64
        %v1883 = vld [vmem:[%s1882] sm:$0xff]
        %v1885 = vsel %vm421, %v1883, 0
        %v1888 = vsel %vm425, %v1881, 0
        %1890 = vmatprep.subr.mxu0 0.0
        %1891 = vmatpush1.msra.mxu0 %v1888
        %1892 = vmatprep.subr.mxu0 0.0
        %1893 = vmatpush1.msra.mxu0 0.0
        %1894 = vmatprep.subr.mxu0 0.0
        %1895 = vmatpush1.msra.mxu0 0.0
        %1896 = vmatprep.subr.mxu0 0.0
        %1897 = vmatpush1.msra.mxu0 0.0
        %1898 = vmatprep.subr.mxu0 0.0
        %1899 = vmatpush1.msra.mxu0 0.0
        %1900 = vmatprep.subr.mxu0 0.0
        %1901 = vmatpush1.msra.mxu0 0.0
        %1902 = vmatprep.subr.mxu0 0.0
        %1903 = vmatpush1.msra.mxu0 0.0
        %1904 = vmatprep.subr.mxu0 0.0
        %1905 = vmatpush1.msra.mxu0 0.0
        %1906 = vmatprep.subr.mxu0 0.0
        %1907 = vmatpush1.msra.mxu0 0.0
        %1908 = vmatprep.subr.mxu0 0.0
        %1909 = vmatpush1.msra.mxu0 0.0
        %1910 = vmatprep.subr.mxu0 0.0
        %1911 = vmatpush1.msra.mxu0 0.0
        %1912 = vmatprep.subr.mxu0 0.0
        %1913 = vmatpush1.msra.mxu0 0.0
        %1914 = vmatprep.subr.mxu0 0.0
        %1915 = vmatpush1.msra.mxu0 0.0
        %1916 = vmatprep.subr.mxu0 0.0
        %1917 = vmatpush1.msra.mxu0 0.0
        %1918 = vmatprep.subr.mxu0 0.0
        %1919 = vmatpush1.msra.mxu0 0.0
        %1920 = vmatprep.subr.mxu0 0.0
        %1921 = vmatpush1.msra.mxu0 0.0
        %1922 = vmatprep.subr.mxu0 0.0
        %1923 = vmatpush1.msra.mxu0 0.0
        %1924 = vmatprep.subr.mxu0 0.0
        %1925 = vmatpush1.msra.mxu0 0.0
        %1926 = vmatprep.subr.mxu0 0.0
        %1927 = vmatpush1.msra.mxu0 0.0
        %1928 = vmatprep.subr.mxu0 0.0
        %1929 = vmatpush1.msra.mxu0 0.0
        %1930 = vmatprep.subr.mxu0 0.0
        %1931 = vmatpush1.msra.mxu0 0.0
        %1932 = vmatprep.subr.mxu0 0.0
        %1933 = vmatpush1.msra.mxu0 0.0
        %1934 = vmatprep.subr.mxu0 0.0
        %1935 = vmatpush1.msra.mxu0 0.0
        %1936 = vmatprep.subr.mxu0 0.0
        %1937 = vmatpush1.msra.mxu0 0.0
        %1938 = vmatprep.subr.mxu0 0.0
        %1939 = vmatpush1.msra.mxu0 0.0
        %1940 = vmatprep.subr.mxu0 0.0
        %1941 = vmatpush1.msra.mxu0 0.0
        %1942 = vmatprep.subr.mxu0 0.0
        %1943 = vmatpush1.msra.mxu0 0.0
        %1944 = vmatprep.subr.mxu0 0.0
        %1945 = vmatpush1.msra.mxu0 0.0
        %1946 = vmatprep.subr.mxu0 0.0
        %1947 = vmatpush1.msra.mxu0 0.0
        %1948 = vmatprep.subr.mxu0 0.0
        %1949 = vmatpush1.msra.mxu0 0.0
        %1950 = vmatprep.subr.mxu0 0.0
        %1951 = vmatpush1.msra.mxu0 0.0
        %1952 = vmatprep.subr.mxu0 0.0
        %1953 = vmatpush1.msra.mxu0 0.0
        %1954 = vmatprep.mubr.f32.mxu0 0.0
        %1955 = vmatmul.mubr.f32.gmra.mrb[0].mxu0 %v1885
        %v1956 = vpop.f32.mrb[0].mxu0
        %v1957 = vadd.f32 0.0, %v1956
        %v1958 = vpop.f32.mrb[0].mxu0
        %1959 = vdwg.mxu0
        %v1960 = vadd.f32 %v1758, %v1957
        %v1961 = vld [vmem:[%s2] sm:$0xff]
        %1963 = vset.pattern.permute.xlu0 0
        %1964 = vperm.xlu0 %1963, %v1961
        %v1965 = vpop.permute.xlu0 %1964
        %v1967 = vadd.f32 %v1960, %v1965
        %1968 = vst [vmem:[%s177] sm:$0xff] %v1967
        %s1969 = sand.u32 %s107, 1
        %s1970 = scalar_lea.sflag [#allocation3], %s1969
        %s1971 = sand.u32 %s107, 1
        %s1972 = smul.addr %s1971, 8
        %s1973 = scalar_lea.vmem [#allocation2], %s1972
        // Predicated region
        $region33: #{tpu_custom_call.1} parent=31 // pred_check
          %p1974 = pneg %p117
        $region34: #{tpu_custom_call.1} parent=31 // pred_check_branch
          %1976 = sbr.rel (%p1974) target = $region36
        $region35: #{tpu_custom_call.1} parent=31 // pred_region
          %s1978 = ssub.s32 128, 128
          %1979 = vsyncadd %s1970, %s1978
          %s1980 = smul.addr %s21, 2
          %s1981 = sadd.s32 %s22, %s1980
          %s1982 = smul.addr %s1981, 128
          %s1983 = scalar_lea.hbm %s3, %s1982
          %s1985 = sshll.u32 %s1973, 4
          %s1986 = int_to_ptr.vmem [resolvable:$true] %s1985
          %1988 = dma.vmem_to_hbm [thread:$0]  %s1986, 128, %s1983, %s1970
        $region36: #{tpu_custom_call.1} parent=31 // pred_fallthru
          _
      $region32: #{tpu_custom_call.1} parent=5 // pred_fallthru
        _
      %p1989 = scmp.le.s32.totalorder 2, %s12
      // Predicated region
      $region37: #{tpu_custom_call.1} parent=5 // pred_check
        %p1990 = pneg %p1989
      $region38: #{tpu_custom_call.1} parent=5 // pred_check_branch
        %1992 = sbr.rel (%p1990) target = $region40
      $region39: #{tpu_custom_call.1} parent=5 // pred_region
        %s1993 = ssub.s32 %s12, 2
        // Predicated region
        $region41: #{tpu_custom_call.1} parent=39 // pred_check
          %p1994 = pneg %p123
        $region42: #{tpu_custom_call.1} parent=39 // pred_check_branch
          %1996 = sbr.rel (%p1994) target = $region44
        $region43: #{tpu_custom_call.1} parent=39 // pred_region
          %s1997 = sand.u32 %s108, 1
          %s1998 = scalar_lea.sflag [#allocation3], %s1997
          %s1999 = sand.u32 %s108, 1
          %s2000 = smul.addr %s1999, 8
          %s2001 = scalar_lea.vmem [#allocation2], %s2000
          %2002 = dma.done %s1998, 128
        $region44: #{tpu_custom_call.1} parent=39 // pred_fallthru
          _
      $region40: #{tpu_custom_call.1} parent=5 // pred_fallthru
        _
    $region6: #{tpu_custom_call.1} parent=1 // loop_footer
      %s16 = sadd.s32 1, %s12
    $region7: #{tpu_custom_call.1} parent=1 // loop_footer_branch
      %11 = sbr.rel target = $region3
    $region8: #{tpu_custom_call.1} parent=1 // loop_exit
      _
    %2003 = vsyncpa [#allocation3], 1
    %s2004 = scalar_lea.sflag [#allocation3], 1
    %2005 = vsyncpa %s2004, 1

</llo_original>
